<compile_context>
chip_gen: v6e
topology: v6e:2x2x1
jax: 0.10.0
libtpu: 0.0.40
codegen_flags: <defaults>
</compile_context>

<pallas_src>
import jax
import jax.numpy as jnp
from jax import lax
from jax.experimental import pallas as pl
from jax.experimental.pallas import tpu as pltpu

HIDDEN_LAYERS = 200
NUMBER_OF_CLASSES = 2

H_PAD = 256   # HIDDEN_LAYERS padded to a lane multiple
C_PAD = 128   # class dim padded to one full lane group


def _leaky_relu(x, negative_slope=0.01):
    # One VPU op (mul + max) instead of compare + select.
    return jnp.maximum(x, negative_slope * x)


def gmrt_linear_kernel(
    # auto-DMA'd VMEM inputs
    x_ref, w12_ref, b1_ref, w2a_ref, b2_ref,
    b3_ref, b4_ref, b5_ref, b6_ref,
    # raw HBM inputs (manually prefetched)
    w3_hbm, w4_hbm, w5_hbm, w6_hbm,
    # output
    o_ref,
    # scratch
    w3_buf, w4_buf, w5_buf, w6_buf, dma_sem,
):
    # Kick off HBM->VMEM prefetch of the later-layer weights immediately so the
    # DMAs stream in behind fc1/fc2 compute instead of serializing up front.
    cp3 = pltpu.make_async_copy(w3_hbm, w3_buf, dma_sem.at[0]); cp3.start()
    cp4 = pltpu.make_async_copy(w4_hbm, w4_buf, dma_sem.at[1]); cp4.start()
    cp5 = pltpu.make_async_copy(w5_hbm, w5_buf, dma_sem.at[2]); cp5.start()
    cp6 = pltpu.make_async_copy(w6_hbm, w6_buf, dma_sem.at[3]); cp6.start()

    x = x_ref[...]                                             # (B, D_PAD)

    # fc1 and the x-branch of fc2 fused into a single MXU pass:
    #   x @ [W1 | W2b]  -> split at the lane-aligned 256 boundary.
    t = jnp.dot(x, w12_ref[...], preferred_element_type=jnp.float32)  # (B, 2*H_PAD)
    h = _leaky_relu(t[:, :H_PAD] + b1_ref[...])

    # fc2: cat((h, x), dim=1) @ W2 == h @ W2[:H] + x @ W2[H:]
    h = _leaky_relu(
        jnp.dot(h, w2a_ref[...], preferred_element_type=jnp.float32)
        + t[:, H_PAD:] + b2_ref[...]
    )
    # dropout: identity in eval mode

    cp3.wait()
    h = _leaky_relu(
        jnp.dot(h, w3_buf[...], preferred_element_type=jnp.float32) + b3_ref[...])

    cp4.wait()
    h = _leaky_relu(
        jnp.dot(h, w4_buf[...], preferred_element_type=jnp.float32) + b4_ref[...])
    # dropout: identity in eval mode

    cp5.wait()
    h = _leaky_relu(
        jnp.dot(h, w5_buf[...], preferred_element_type=jnp.float32) + b5_ref[...])

    cp6.wait()
    logits = _leaky_relu(
        jnp.dot(h, w6_buf[...], preferred_element_type=jnp.float32) + b6_ref[...])

    # Softmax over dim=1 restricted to the logical class columns: padded lanes
    # are pushed to a huge negative so exp() underflows to exactly 0 there.
    col = lax.broadcasted_iota(jnp.int32, logits.shape, 1)
    logits = jnp.where(col < NUMBER_OF_CLASSES, logits, jnp.float32(-1e30))
    m = jnp.max(logits, axis=1, keepdims=True)
    e = jnp.exp(logits - m)
    o_ref[...] = e / jnp.sum(e, axis=1, keepdims=True)


def gmrt_linear_forward(x, kparams):
    """x: (B, D) float32.  kparams: padded/fused kernel parameters (see prepare_params)."""
    B, D = x.shape
    D_PAD = kparams["w12"].shape[0]
    x_pad = jnp.pad(x.astype(jnp.float32), ((0, 0), (0, D_PAD - D)))

    vmem_args = (
        x_pad,
        kparams["w12"], kparams["b1"], kparams["w2a"], kparams["b2"],
        kparams["b3"], kparams["b4"], kparams["b5"], kparams["b6"],
    )
    hbm_args = (kparams["w3"], kparams["w4"], kparams["w5"], kparams["w6"])

    def full_vmem(a):
        return pl.BlockSpec(a.shape, lambda: tuple(0 for _ in a.shape),
                            memory_space=pltpu.VMEM)

    flops = 2 * B * (D_PAD * 2 * H_PAD + 4 * H_PAD * H_PAD + H_PAD * C_PAD)
    bytes_accessed = 4 * (
        x_pad.size
        + sum(int(a.size) for a in vmem_args[1:])
        + sum(int(a.size) for a in hbm_args)
        + B * C_PAD
    )

    out = pl.pallas_call(
        gmrt_linear_kernel,
        out_shape=jax.ShapeDtypeStruct((B, C_PAD), jnp.float32),
        in_specs=[full_vmem(a) for a in vmem_args]
                 + [pl.BlockSpec(memory_space=pl.ANY) for _ in hbm_args],
        out_specs=pl.BlockSpec((B, C_PAD), lambda: (0, 0),
                               memory_space=pltpu.VMEM),
        scratch_shapes=[
            pltpu.VMEM((H_PAD, H_PAD), jnp.float32),   # w3
            pltpu.VMEM((H_PAD, H_PAD), jnp.float32),   # w4
            pltpu.VMEM((H_PAD, H_PAD), jnp.float32),   # w5
            pltpu.VMEM((H_PAD, C_PAD), jnp.float32),   # w6
            pltpu.SemaphoreType.DMA((4,)),
        ],
        cost_estimate=pl.CostEstimate(
            flops=int(flops),
            transcendentals=int(B * C_PAD),
            bytes_accessed=int(bytes_accessed),
        ),
    )(*vmem_args, *hbm_args)

    return out[:, :NUMBER_OF_CLASSES]


def init_params(key, sequence_length):
    """Logical (unpadded) parameters, mimicking PyTorch Linear default init:
    U(-1/sqrt(fan_in), 1/sqrt(fan_in)) for both weight and bias."""
    D = 6 + sequence_length * 7
    H = HIDDEN_LAYERS
    C = NUMBER_OF_CLASSES

    def linear(key, fan_in, fan_out):
        kw, kb = jax.random.split(key)
        bound = 1.0 / jnp.sqrt(fan_in)
        # stored pre-transposed: (in, out)
        w = jax.random.uniform(kw, (fan_in, fan_out), jnp.float32, -bound, bound)
        b = jax.random.uniform(kb, (1, fan_out), jnp.float32, -bound, bound)
        return w, b

    keys = jax.random.split(key, 6)
    w1, b1 = linear(keys[0], D, H)
    w2, b2 = linear(keys[1], H + D, H)
    w3, b3 = linear(keys[2], H, H)
    w4, b4 = linear(keys[3], H, H)
    w5, b5 = linear(keys[4], H, H)
    w6, b6 = linear(keys[5], H, C)

    return {
        "w1": w1, "b1": b1,
        # split fc2 weight rows: first H rows multiply h1, last D rows multiply x
        "w2a": w2[:H, :], "w2b": w2[H:, :], "b2": b2,
        "w3": w3, "b3": b3,
        "w4": w4, "b4": b4,
        "w5": w5, "b5": b5,
        "w6": w6, "b6": b6,
    }


def prepare_params(params, D):
    """Pad to lane-aligned shapes (D->mult of 8, H->256, C->128) and fuse [W1 | W2b].

    All padding is with zeros; padded hidden columns remain exactly zero through
    every layer (bias pad is zero and leaky_relu(0) == 0), so results match the
    unpadded computation exactly."""
    D_PAD = ((D + 7) // 8) * 8

    def pad(a, rows, cols):
        return jnp.pad(a, ((0, rows - a.shape[0]), (0, cols - a.shape[1])))

    w1 = pad(params["w1"], D_PAD, H_PAD)
    w2b = pad(params["w2b"], D_PAD, H_PAD)
    return {
        "w12": jnp.concatenate([w1, w2b], axis=1),        # (D_PAD, 2*H_PAD)
        "b1": pad(params["b1"], 1, H_PAD),
        "w2a": pad(params["w2a"], H_PAD, H_PAD),
        "b2": pad(params["b2"], 1, H_PAD),
        "w3": pad(params["w3"], H_PAD, H_PAD),
        "b3": pad(params["b3"], 1, H_PAD),
        "w4": pad(params["w4"], H_PAD, H_PAD),
        "b4": pad(params["b4"], 1, H_PAD),
        "w5": pad(params["w5"], H_PAD, H_PAD),
        "b5": pad(params["b5"], 1, H_PAD),
        "w6": pad(params["w6"], H_PAD, C_PAD),
        "b6": pad(params["b6"], 1, C_PAD),
    }


def reference_forward(x, params):
    """Plain-JAX reference (unpadded) for sanity checking."""
    lr = lambda v: jnp.maximum(v, 0.01 * v)
    h = lr(x @ params["w1"] + params["b1"])
    h = lr(h @ params["w2a"] + x @ params["w2b"] + params["b2"])
    h = lr(h @ params["w3"] + params["b3"])
    h = lr(h @ params["w4"] + params["b4"])
    h = lr(h @ params["w5"] + params["b5"])
    logits = lr(h @ params["w6"] + params["b6"])
    return jax.nn.softmax(logits, axis=1)


if __name__ == "__main__":
    sequence_length = 8
    batch = 8
    D = 6 + sequence_length * 7  # 62

    key = jax.random.PRNGKey(0)
    kx, kp = jax.random.split(key)
    x = jax.random.normal(kx, (batch, D), dtype=jnp.float32)

    params = init_params(kp, sequence_length)        # logical params (reference)
    kparams = prepare_params(params, D)              # padded / fused params (kernel)

    out = gmrt_linear_forward(x, kparams)
    out = jax.block_until_ready(out)

    ref = reference_forward(x, params)
    assert out.shape == (batch, NUMBER_OF_CLASSES)
    assert jnp.allclose(jnp.sum(out, axis=1), 1.0, atol=1e-5)
    assert jnp.allclose(out, ref, atol=1e-5, rtol=1e-5)

    print("KERNEL_OK")
</pallas_src>

<mosaic_0001>
module attributes {stable_mosaic.version = 11 : i64} {
  func.func @gmrt_linear_kernel(%arg0: memref<8x64xf32, #tpu.memory_space<vmem>>, %arg1: memref<64x512xf32, #tpu.memory_space<vmem>>, %arg2: memref<1x256xf32, #tpu.memory_space<vmem>>, %arg3: memref<256x256xf32, #tpu.memory_space<vmem>>, %arg4: memref<1x256xf32, #tpu.memory_space<vmem>>, %arg5: memref<1x256xf32, #tpu.memory_space<vmem>>, %arg6: memref<1x256xf32, #tpu.memory_space<vmem>>, %arg7: memref<1x256xf32, #tpu.memory_space<vmem>>, %arg8: memref<1x128xf32, #tpu.memory_space<vmem>>, %arg9: memref<256x256xf32, #tpu.memory_space<any>>, %arg10: memref<256x256xf32, #tpu.memory_space<any>>, %arg11: memref<256x256xf32, #tpu.memory_space<any>>, %arg12: memref<256x128xf32, #tpu.memory_space<any>>, %arg13: memref<8x128xf32, #tpu.memory_space<vmem>>, %arg14: memref<256x256xf32, #tpu.memory_space<vmem>>, %arg15: memref<256x256xf32, #tpu.memory_space<vmem>>, %arg16: memref<256x256xf32, #tpu.memory_space<vmem>>, %arg17: memref<256x128xf32, #tpu.memory_space<vmem>>, %arg18: memref<4x!tpu.dma_semaphore, #tpu.memory_space<semaphore_mem>>) attributes {dimension_semantics = [], scalar_prefetch = 0 : i64, scratch_operands = 5 : i64, tpu.core_type = #tpu.core_type<tc>} {
    %c0_i32 = arith.constant 0 : i32
    %0 = tpu.memref_slice %arg18[%c0_i32] : memref<4x!tpu.dma_semaphore, #tpu.memory_space<semaphore_mem>> -> memref<1x!tpu.dma_semaphore, #tpu.memory_space<semaphore_mem>>
    %1 = tpu.memref_squeeze %0 : memref<1x!tpu.dma_semaphore, #tpu.memory_space<semaphore_mem>> -> memref<!tpu.dma_semaphore, #tpu.memory_space<semaphore_mem>>
    tpu.enqueue_dma source(%arg9 : memref<256x256xf32, #tpu.memory_space<any>>) target(%arg14 : memref<256x256xf32, #tpu.memory_space<vmem>>) target_semaphore(%1 : memref<!tpu.dma_semaphore, #tpu.memory_space<semaphore_mem>>)
    %c1_i32 = arith.constant 1 : i32
    %2 = tpu.memref_slice %arg18[%c1_i32] : memref<4x!tpu.dma_semaphore, #tpu.memory_space<semaphore_mem>> -> memref<1x!tpu.dma_semaphore, #tpu.memory_space<semaphore_mem>>
    %3 = tpu.memref_squeeze %2 : memref<1x!tpu.dma_semaphore, #tpu.memory_space<semaphore_mem>> -> memref<!tpu.dma_semaphore, #tpu.memory_space<semaphore_mem>>
    tpu.enqueue_dma source(%arg10 : memref<256x256xf32, #tpu.memory_space<any>>) target(%arg15 : memref<256x256xf32, #tpu.memory_space<vmem>>) target_semaphore(%3 : memref<!tpu.dma_semaphore, #tpu.memory_space<semaphore_mem>>)
    %c2_i32 = arith.constant 2 : i32
    %4 = tpu.memref_slice %arg18[%c2_i32] : memref<4x!tpu.dma_semaphore, #tpu.memory_space<semaphore_mem>> -> memref<1x!tpu.dma_semaphore, #tpu.memory_space<semaphore_mem>>
    %5 = tpu.memref_squeeze %4 : memref<1x!tpu.dma_semaphore, #tpu.memory_space<semaphore_mem>> -> memref<!tpu.dma_semaphore, #tpu.memory_space<semaphore_mem>>
    tpu.enqueue_dma source(%arg11 : memref<256x256xf32, #tpu.memory_space<any>>) target(%arg16 : memref<256x256xf32, #tpu.memory_space<vmem>>) target_semaphore(%5 : memref<!tpu.dma_semaphore, #tpu.memory_space<semaphore_mem>>)
    %c3_i32 = arith.constant 3 : i32
    %6 = tpu.memref_slice %arg18[%c3_i32] : memref<4x!tpu.dma_semaphore, #tpu.memory_space<semaphore_mem>> -> memref<1x!tpu.dma_semaphore, #tpu.memory_space<semaphore_mem>>
    %7 = tpu.memref_squeeze %6 : memref<1x!tpu.dma_semaphore, #tpu.memory_space<semaphore_mem>> -> memref<!tpu.dma_semaphore, #tpu.memory_space<semaphore_mem>>
    tpu.enqueue_dma source(%arg12 : memref<256x128xf32, #tpu.memory_space<any>>) target(%arg17 : memref<256x128xf32, #tpu.memory_space<vmem>>) target_semaphore(%7 : memref<!tpu.dma_semaphore, #tpu.memory_space<semaphore_mem>>)
    %c0 = arith.constant 0 : index
    %c0_0 = arith.constant 0 : index
    %8 = vector.load %arg0[%c0, %c0_0] : memref<8x64xf32, #tpu.memory_space<vmem>>, vector<8x64xf32>
    %c0_1 = arith.constant 0 : index
    %c0_2 = arith.constant 0 : index
    %9 = vector.load %arg1[%c0_1, %c0_2] : memref<64x512xf32, #tpu.memory_space<vmem>>, vector<64x512xf32>
    %cst = arith.constant dense<0.000000e+00> : vector<8x512xf32>
    %10 = tpu.matmul %8, %9, %cst {dimension_numbers = #tpu.dot_dimension_numbers<[1], [0], [0], [1], [0, 0, 1, 1], [], []>} : vector<8x64xf32>, vector<64x512xf32>, vector<8x512xf32> -> vector<8x512xf32>
    %11 = vector.extract_strided_slice %10 {offsets = [0, 0], sizes = [8, 256], strides = [1, 1]} : vector<8x512xf32> to vector<8x256xf32>
    %c0_3 = arith.constant 0 : index
    %c0_4 = arith.constant 0 : index
    %12 = vector.load %arg2[%c0_3, %c0_4] : memref<1x256xf32, #tpu.memory_space<vmem>>, vector<1x256xf32>
    %13 = vector.broadcast %12 : vector<1x256xf32> to vector<8x256xf32>
    %14 = arith.addf %11, %13 : vector<8x256xf32>
    %cst_5 = arith.constant 0.00999999977 : f32
    %15 = vector.broadcast %cst_5 : f32 to vector<8x256xf32>
    %16 = arith.mulf %15, %14 : vector<8x256xf32>
    %17 = arith.maximumf %14, %16 : vector<8x256xf32>
    %c0_6 = arith.constant 0 : index
    %c0_7 = arith.constant 0 : index
    %18 = vector.load %arg3[%c0_6, %c0_7] : memref<256x256xf32, #tpu.memory_space<vmem>>, vector<256x256xf32>
    %cst_8 = arith.constant dense<0.000000e+00> : vector<8x256xf32>
    %19 = tpu.matmul %17, %18, %cst_8 {dimension_numbers = #tpu.dot_dimension_numbers<[1], [0], [0], [1], [0, 0, 1, 1], [], []>} : vector<8x256xf32>, vector<256x256xf32>, vector<8x256xf32> -> vector<8x256xf32>
    %20 = vector.extract_strided_slice %10 {offsets = [0, 256], sizes = [8, 256], strides = [1, 1]} : vector<8x512xf32> to vector<8x256xf32>
    %21 = arith.addf %19, %20 : vector<8x256xf32>
    %c0_9 = arith.constant 0 : index
    %c0_10 = arith.constant 0 : index
    %22 = vector.load %arg4[%c0_9, %c0_10] : memref<1x256xf32, #tpu.memory_space<vmem>>, vector<1x256xf32>
    %23 = vector.broadcast %22 : vector<1x256xf32> to vector<8x256xf32>
    %24 = arith.addf %21, %23 : vector<8x256xf32>
    %cst_11 = arith.constant 0.00999999977 : f32
    %25 = vector.broadcast %cst_11 : f32 to vector<8x256xf32>
    %26 = arith.mulf %25, %24 : vector<8x256xf32>
    %27 = arith.maximumf %24, %26 : vector<8x256xf32>
    %c0_i32_12 = arith.constant 0 : i32
    %28 = tpu.memref_slice %arg18[%c0_i32_12] : memref<4x!tpu.dma_semaphore, #tpu.memory_space<semaphore_mem>> -> memref<1x!tpu.dma_semaphore, #tpu.memory_space<semaphore_mem>>
    %29 = tpu.memref_squeeze %28 : memref<1x!tpu.dma_semaphore, #tpu.memory_space<semaphore_mem>> -> memref<!tpu.dma_semaphore, #tpu.memory_space<semaphore_mem>>
    tpu.wait_dma2 semaphore(%29 : memref<!tpu.dma_semaphore, #tpu.memory_space<semaphore_mem>>) src(%arg9 : memref<256x256xf32, #tpu.memory_space<any>>) dst(%arg14 : memref<256x256xf32, #tpu.memory_space<vmem>>)
    %c0_13 = arith.constant 0 : index
    %c0_14 = arith.constant 0 : index
    %30 = vector.load %arg14[%c0_13, %c0_14] : memref<256x256xf32, #tpu.memory_space<vmem>>, vector<256x256xf32>
    %cst_15 = arith.constant dense<0.000000e+00> : vector<8x256xf32>
    %31 = tpu.matmul %27, %30, %cst_15 {dimension_numbers = #tpu.dot_dimension_numbers<[1], [0], [0], [1], [0, 0, 1, 1], [], []>} : vector<8x256xf32>, vector<256x256xf32>, vector<8x256xf32> -> vector<8x256xf32>
    %c0_16 = arith.constant 0 : index
    %c0_17 = arith.constant 0 : index
    %32 = vector.load %arg5[%c0_16, %c0_17] : memref<1x256xf32, #tpu.memory_space<vmem>>, vector<1x256xf32>
    %33 = vector.broadcast %32 : vector<1x256xf32> to vector<8x256xf32>
    %34 = arith.addf %31, %33 : vector<8x256xf32>
    %cst_18 = arith.constant 0.00999999977 : f32
    %35 = vector.broadcast %cst_18 : f32 to vector<8x256xf32>
    %36 = arith.mulf %35, %34 : vector<8x256xf32>
    %37 = arith.maximumf %34, %36 : vector<8x256xf32>
    %c1_i32_19 = arith.constant 1 : i32
    %38 = tpu.memref_slice %arg18[%c1_i32_19] : memref<4x!tpu.dma_semaphore, #tpu.memory_space<semaphore_mem>> -> memref<1x!tpu.dma_semaphore, #tpu.memory_space<semaphore_mem>>
    %39 = tpu.memref_squeeze %38 : memref<1x!tpu.dma_semaphore, #tpu.memory_space<semaphore_mem>> -> memref<!tpu.dma_semaphore, #tpu.memory_space<semaphore_mem>>
    tpu.wait_dma2 semaphore(%39 : memref<!tpu.dma_semaphore, #tpu.memory_space<semaphore_mem>>) src(%arg10 : memref<256x256xf32, #tpu.memory_space<any>>) dst(%arg15 : memref<256x256xf32, #tpu.memory_space<vmem>>)
    %c0_20 = arith.constant 0 : index
    %c0_21 = arith.constant 0 : index
    %40 = vector.load %arg15[%c0_20, %c0_21] : memref<256x256xf32, #tpu.memory_space<vmem>>, vector<256x256xf32>
    %cst_22 = arith.constant dense<0.000000e+00> : vector<8x256xf32>
    %41 = tpu.matmul %37, %40, %cst_22 {dimension_numbers = #tpu.dot_dimension_numbers<[1], [0], [0], [1], [0, 0, 1, 1], [], []>} : vector<8x256xf32>, vector<256x256xf32>, vector<8x256xf32> -> vector<8x256xf32>
    %c0_23 = arith.constant 0 : index
    %c0_24 = arith.constant 0 : index
    %42 = vector.load %arg6[%c0_23, %c0_24] : memref<1x256xf32, #tpu.memory_space<vmem>>, vector<1x256xf32>
    %43 = vector.broadcast %42 : vector<1x256xf32> to vector<8x256xf32>
    %44 = arith.addf %41, %43 : vector<8x256xf32>
    %cst_25 = arith.constant 0.00999999977 : f32
    %45 = vector.broadcast %cst_25 : f32 to vector<8x256xf32>
    %46 = arith.mulf %45, %44 : vector<8x256xf32>
    %47 = arith.maximumf %44, %46 : vector<8x256xf32>
    %c2_i32_26 = arith.constant 2 : i32
    %48 = tpu.memref_slice %arg18[%c2_i32_26] : memref<4x!tpu.dma_semaphore, #tpu.memory_space<semaphore_mem>> -> memref<1x!tpu.dma_semaphore, #tpu.memory_space<semaphore_mem>>
    %49 = tpu.memref_squeeze %48 : memref<1x!tpu.dma_semaphore, #tpu.memory_space<semaphore_mem>> -> memref<!tpu.dma_semaphore, #tpu.memory_space<semaphore_mem>>
    tpu.wait_dma2 semaphore(%49 : memref<!tpu.dma_semaphore, #tpu.memory_space<semaphore_mem>>) src(%arg11 : memref<256x256xf32, #tpu.memory_space<any>>) dst(%arg16 : memref<256x256xf32, #tpu.memory_space<vmem>>)
    %c0_27 = arith.constant 0 : index
    %c0_28 = arith.constant 0 : index
    %50 = vector.load %arg16[%c0_27, %c0_28] : memref<256x256xf32, #tpu.memory_space<vmem>>, vector<256x256xf32>
    %cst_29 = arith.constant dense<0.000000e+00> : vector<8x256xf32>
    %51 = tpu.matmul %47, %50, %cst_29 {dimension_numbers = #tpu.dot_dimension_numbers<[1], [0], [0], [1], [0, 0, 1, 1], [], []>} : vector<8x256xf32>, vector<256x256xf32>, vector<8x256xf32> -> vector<8x256xf32>
    %c0_30 = arith.constant 0 : index
    %c0_31 = arith.constant 0 : index
    %52 = vector.load %arg7[%c0_30, %c0_31] : memref<1x256xf32, #tpu.memory_space<vmem>>, vector<1x256xf32>
    %53 = vector.broadcast %52 : vector<1x256xf32> to vector<8x256xf32>
    %54 = arith.addf %51, %53 : vector<8x256xf32>
    %cst_32 = arith.constant 0.00999999977 : f32
    %55 = vector.broadcast %cst_32 : f32 to vector<8x256xf32>
    %56 = arith.mulf %55, %54 : vector<8x256xf32>
    %57 = arith.maximumf %54, %56 : vector<8x256xf32>
    %c3_i32_33 = arith.constant 3 : i32
    %58 = tpu.memref_slice %arg18[%c3_i32_33] : memref<4x!tpu.dma_semaphore, #tpu.memory_space<semaphore_mem>> -> memref<1x!tpu.dma_semaphore, #tpu.memory_space<semaphore_mem>>
    %59 = tpu.memref_squeeze %58 : memref<1x!tpu.dma_semaphore, #tpu.memory_space<semaphore_mem>> -> memref<!tpu.dma_semaphore, #tpu.memory_space<semaphore_mem>>
    tpu.wait_dma2 semaphore(%59 : memref<!tpu.dma_semaphore, #tpu.memory_space<semaphore_mem>>) src(%arg12 : memref<256x128xf32, #tpu.memory_space<any>>) dst(%arg17 : memref<256x128xf32, #tpu.memory_space<vmem>>)
    %c0_34 = arith.constant 0 : index
    %c0_35 = arith.constant 0 : index
    %60 = vector.load %arg17[%c0_34, %c0_35] : memref<256x128xf32, #tpu.memory_space<vmem>>, vector<256x128xf32>
    %cst_36 = arith.constant dense<0.000000e+00> : vector<8x128xf32>
    %61 = tpu.matmul %57, %60, %cst_36 {dimension_numbers = #tpu.dot_dimension_numbers<[1], [0], [0], [1], [0, 0, 1, 1], [], []>} : vector<8x256xf32>, vector<256x128xf32>, vector<8x128xf32> -> vector<8x128xf32>
    %c0_37 = arith.constant 0 : index
    %c0_38 = arith.constant 0 : index
    %62 = vector.load %arg8[%c0_37, %c0_38] : memref<1x128xf32, #tpu.memory_space<vmem>>, vector<1x128xf32>
    %63 = vector.broadcast %62 : vector<1x128xf32> to vector<8x128xf32>
    %64 = arith.addf %61, %63 : vector<8x128xf32>
    %cst_39 = arith.constant 0.00999999977 : f32
    %65 = vector.broadcast %cst_39 : f32 to vector<8x128xf32>
    %66 = arith.mulf %65, %64 : vector<8x128xf32>
    %67 = arith.maximumf %64, %66 : vector<8x128xf32>
    %68 = tpu.iota {dimensions = array<i32: 1>} : vector<8x128xi32>
    %c2_i32_40 = arith.constant 2 : i32
    %69 = vector.broadcast %c2_i32_40 : i32 to vector<8x128xi32>
    %70 = arith.cmpi slt, %68, %69 : vector<8x128xi32>
    %cst_41 = arith.constant -1.000000e+30 : f32
    %71 = vector.broadcast %cst_41 : f32 to vector<8x128xf32>
    %72 = arith.select %70, %67, %71 : vector<8x128xi1>, vector<8x128xf32>
    %cst_42 = arith.constant dense<0xFF800000> : vector<8xf32>
    %73 = vector.multi_reduction <maximumf>, %72, %cst_42 [1] : vector<8x128xf32> to vector<8xf32>
    %74 = vector.shape_cast %73 : vector<8xf32> to vector<8x1xf32>
    %75 = vector.broadcast %74 : vector<8x1xf32> to vector<8x128xf32>
    %76 = arith.subf %72, %75 : vector<8x128xf32>
    %77 = math.exp %76 : vector<8x128xf32>
    %cst_43 = arith.constant dense<0.000000e+00> : vector<8xf32>
    %78 = vector.multi_reduction <add>, %77, %cst_43 [1] : vector<8x128xf32> to vector<8xf32>
    %79 = vector.shape_cast %78 : vector<8xf32> to vector<8x1xf32>
    %80 = vector.broadcast %79 : vector<8x1xf32> to vector<8x128xf32>
    %81 = arith.divf %77, %80 : vector<8x128xf32>
    %c0_44 = arith.constant 0 : index
    %c0_45 = arith.constant 0 : index
    %82 = vector.load %arg13[%c0_44, %c0_45] : memref<8x128xf32, #tpu.memory_space<vmem>>, vector<8x128xf32>
    tpu.vector_store %arg13[%c0_44, %c0_45], %81 {strides = array<i32>} : memref<8x128xf32, #tpu.memory_space<vmem>>, vector<8x128xf32>,
    return
  }
}

</mosaic_0001>

<llo_original>
// kernel: tpu_custom_call.1
$region0: #{tpu_custom_call.1}
  #allocation0 [shape = 'u32[]', space=smem, size = 0x4, offset = 0x4, fixed_abs, tag = 'smem constant byte address 0x4 - core index']
  #allocation1 [shape = 'u32[144,128]{1,0:T(1,128)}', space=vmem, size = 0x12000, scoped, tag = 'internal scratch']
  #allocation2 [shape = 'f32[256,256]{1,0:T(8,128)}', space=vmem, size = 0x40000, scoped, tag = 'scratch operand']
  #allocation3 [shape = 'f32[256,256]{1,0:T(8,128)}', space=vmem, size = 0x40000, scoped, tag = 'scratch operand']
  #allocation4 [shape = 'f32[256,256]{1,0:T(8,128)}', space=vmem, size = 0x40000, scoped, tag = 'scratch operand']
  #allocation5 [shape = 'f32[256,128]{1,0:T(8,128)}', space=vmem, size = 0x20000, scoped, tag = 'scratch operand']
  #allocation6 [shape = 's32[4]{0}', space=sflag, size = 0x10, scoped, tag = 'scratch operand']
  #allocation14 [shape = 's32[]', space=sflag, size = 0x4, offset = 0, fixed_abs, tag = 'sflag constant byte address 0x0 - dummy sync flag']
  #allocation15 [shape = 's32[]', space=sflag, size = 0x4, offset = 0, fixed_abs, tag = 'sflag constant byte address 0x0 - dummy sync flag']
  #allocation16 [shape = 'u32[]', space=smem, size = 0x4, offset = 0x44, fixed_abs, tag = 'smem constant byte address 0x44 - assertion arg 0']
  #allocation17 [shape = 'u32[]', space=smem, size = 0x4, offset = 0x48, fixed_abs, tag = 'smem constant byte address 0x48 - assertion arg 1']
  #allocation18 [shape = 's32[]', space=sflag, size = 0x4, offset = 0, fixed_abs, tag = 'sflag constant byte address 0x0 - dummy sync flag']
  #allocation19 [shape = 's32[]', space=sflag, size = 0x4, offset = 0, fixed_abs, tag = 'sflag constant byte address 0x0 - dummy sync flag']
  #allocation20 [shape = 's32[]', space=sflag, size = 0x4, offset = 0, fixed_abs, tag = 'sflag constant byte address 0x0 - dummy sync flag']
  #allocation21 [shape = 's32[]', space=sflag, size = 0x4, offset = 0, fixed_abs, tag = 'sflag constant byte address 0x0 - dummy sync flag']
  #allocation22 [shape = 's32[]', space=sflag, size = 0x4, offset = 0, fixed_abs, tag = 'sflag constant byte address 0x0 - dummy sync flag']
  #allocation23 [shape = 's32[]', space=sflag, size = 0x4, offset = 0, fixed_abs, tag = 'sflag constant byte address 0x0 - dummy sync flag']
  %s0 = inlined_call_operand.hbm [shape: f32[8,64], index: 0, kind: input, shape index: {}]
  %s1 = inlined_call_operand.hbm [shape: f32[64,512], index: 1, kind: input, shape index: {}]
  %s2 = inlined_call_operand.vmem [shape: f32[1,256], index: 2, kind: input, shape index: {}]
  %s3 = inlined_call_operand.hbm [shape: f32[256,256], index: 3, kind: input, shape index: {}]
  %s4 = inlined_call_operand.vmem [shape: f32[1,256], index: 4, kind: input, shape index: {}]
  %s5 = inlined_call_operand.vmem [shape: f32[1,256], index: 5, kind: input, shape index: {}]
  %s6 = inlined_call_operand.vmem [shape: f32[1,256], index: 6, kind: input, shape index: {}]
  %s7 = inlined_call_operand.vmem [shape: f32[1,256], index: 7, kind: input, shape index: {}]
  %s8 = inlined_call_operand.vmem [shape: f32[1,128], index: 8, kind: input, shape index: {}]
  %s9 = inlined_call_operand.hbm [shape: f32[256,256], index: 9, kind: input, shape index: {}]
  %s10 = inlined_call_operand.hbm [shape: f32[256,256], index: 10, kind: input, shape index: {}]
  %s11 = inlined_call_operand.hbm [shape: f32[256,256], index: 11, kind: input, shape index: {}]
  %s12 = inlined_call_operand.hbm [shape: f32[256,128], index: 12, kind: input, shape index: {}]
  %s13 = inlined_call_operand.hbm [shape: f32[8,128], index: 13, kind: output, shape index: {}]
  %s14 = sld [smem:[#allocation0]]
  $region74: #{tpu_custom_call.1} parent=0
    _
  %s16 = ssub.s32 1, %s14
  %s17 = scalar_select 0, %s16, %s14
  $region1: #{tpu_custom_call.1} parent=0
    #allocation7 [shape = 'u8[4096]{0}', space=vmem, size = 0x1000, scoped, tag = 'input window, operand 0, single buffered']
    #allocation8 [shape = 's32[1]{0}', space=sflag, size = 0x4, scoped, tag = 'scoped memory for tpu_custom_call.1']
    #allocation9 [shape = 's32[1]{0}', space=sflag, size = 0x4, scoped, tag = 'scoped memory for tpu_custom_call.1']
    #allocation10 [shape = 'u8[131072]{0}', space=vmem, size = 0x20000, scoped, tag = 'input window, operand 1, single buffered']
    #allocation11 [shape = 's32[1]{0}', space=sflag, size = 0x4, scoped, tag = 'scoped memory for tpu_custom_call.1']
    #allocation12 [shape = 'u8[262144]{0}', space=vmem, size = 0x40000, scoped, tag = 'input window, operand 3, single buffered']
    #allocation13 [shape = 'u8[4096]{0}', space=vmem, size = 0x1000, scoped, tag = 'output window, operand 0, single buffered']
    %18 = vsyncpa [#allocation8], 0
    %19 = vsyncpa [#allocation11], 0
    %20 = vsyncpa [#allocation9], 0
    // Predicated region
    $region2: #{tpu_custom_call.1} parent=1 // pred_check
      _
    $region3: #{tpu_custom_call.1} parent=1 // pred_check_branch
      %22 = sbr.rel (0) target = $region5
    $region4: #{tpu_custom_call.1} parent=1 // pred_region
      %s24 = ssub.s32 128, 128
      %25 = vsyncadd [#allocation8], %s24
      %s27 = sshll.u32 [#allocation7], 4
      %s28 = int_to_ptr.vmem [resolvable:$true] %s27
      %30 = dma.hbm_to_vmem [thread:$0]  %s0, 128, %s28, [#allocation8]
    $region5: #{tpu_custom_call.1} parent=1 // pred_fallthru
      _
    // Predicated region
    $region6: #{tpu_custom_call.1} parent=1 // pred_check
      _
    $region7: #{tpu_custom_call.1} parent=1 // pred_check_branch
      %32 = sbr.rel (0) target = $region9
    $region8: #{tpu_custom_call.1} parent=1 // pred_region
      %s34 = ssub.s32 4096, 4096
      %35 = vsyncadd [#allocation11], %s34
      %s36 = sshll.u32 [#allocation10], 4
      %s37 = int_to_ptr.vmem [resolvable:$true] %s36
      %42 = dma.hbm_to_vmem [thread:$0]  %s1, 4096, %s37, [#allocation11], 512, 512, 32
    $region9: #{tpu_custom_call.1} parent=1 // pred_fallthru
      _
    // Predicated region
    $region10: #{tpu_custom_call.1} parent=1 // pred_check
      _
    $region11: #{tpu_custom_call.1} parent=1 // pred_check_branch
      %44 = sbr.rel (0) target = $region13
    $region12: #{tpu_custom_call.1} parent=1 // pred_region
      _
    $region13: #{tpu_custom_call.1} parent=1 // pred_fallthru
      _
    // Predicated region
    $region14: #{tpu_custom_call.1} parent=1 // pred_check
      _
    $region15: #{tpu_custom_call.1} parent=1 // pred_check_branch
      %46 = sbr.rel (0) target = $region17
    $region16: #{tpu_custom_call.1} parent=1 // pred_region
      %s48 = ssub.s32 8192, 8192
      %49 = vsyncadd [#allocation11], %s48
      %s50 = sshll.u32 [#allocation12], 4
      %s51 = int_to_ptr.vmem [resolvable:$true] %s50
      %56 = dma.hbm_to_vmem [thread:$0]  %s3, 8192, %s51, [#allocation11], 256, 256, 16
    $region17: #{tpu_custom_call.1} parent=1 // pred_fallthru
      _
    // Predicated region
    $region18: #{tpu_custom_call.1} parent=1 // pred_check
      _
    $region19: #{tpu_custom_call.1} parent=1 // pred_check_branch
      %58 = sbr.rel (0) target = $region21
    $region20: #{tpu_custom_call.1} parent=1 // pred_region
      _
    $region21: #{tpu_custom_call.1} parent=1 // pred_fallthru
      _
    // Predicated region
    $region22: #{tpu_custom_call.1} parent=1 // pred_check
      _
    $region23: #{tpu_custom_call.1} parent=1 // pred_check_branch
      %60 = sbr.rel (0) target = $region25
    $region24: #{tpu_custom_call.1} parent=1 // pred_region
      _
    $region25: #{tpu_custom_call.1} parent=1 // pred_fallthru
      _
    // Predicated region
    $region26: #{tpu_custom_call.1} parent=1 // pred_check
      _
    $region27: #{tpu_custom_call.1} parent=1 // pred_check_branch
      %62 = sbr.rel (0) target = $region29
    $region28: #{tpu_custom_call.1} parent=1 // pred_region
      _
    $region29: #{tpu_custom_call.1} parent=1 // pred_fallthru
      _
    // Predicated region
    $region30: #{tpu_custom_call.1} parent=1 // pred_check
      _
    $region31: #{tpu_custom_call.1} parent=1 // pred_check_branch
      %64 = sbr.rel (0) target = $region33
    $region32: #{tpu_custom_call.1} parent=1 // pred_region
      _
    $region33: #{tpu_custom_call.1} parent=1 // pred_fallthru
      _
    // Predicated region
    $region34: #{tpu_custom_call.1} parent=1 // pred_check
      _
    $region35: #{tpu_custom_call.1} parent=1 // pred_check_branch
      %66 = sbr.rel (0) target = $region37
    $region36: #{tpu_custom_call.1} parent=1 // pred_region
      _
    $region37: #{tpu_custom_call.1} parent=1 // pred_fallthru
      _
    // Predicated region
    $region38: #{tpu_custom_call.1} parent=1 // pred_check
      _
    $region39: #{tpu_custom_call.1} parent=1 // pred_check_branch
      %68 = sbr.rel (0) target = $region41
    $region40: #{tpu_custom_call.1} parent=1 // pred_region
      %69 = dma.done [#allocation8], 128
    $region41: #{tpu_custom_call.1} parent=1 // pred_fallthru
      _
    // Predicated region
    $region42: #{tpu_custom_call.1} parent=1 // pred_check
      _
    $region43: #{tpu_custom_call.1} parent=1 // pred_check_branch
      %71 = sbr.rel (0) target = $region45
    $region44: #{tpu_custom_call.1} parent=1 // pred_region
      %72 = dma.done [#allocation11], 4096
    $region45: #{tpu_custom_call.1} parent=1 // pred_fallthru
      _
    // Predicated region
    $region46: #{tpu_custom_call.1} parent=1 // pred_check
      _
    $region47: #{tpu_custom_call.1} parent=1 // pred_check_branch
      %74 = sbr.rel (0) target = $region49
    $region48: #{tpu_custom_call.1} parent=1 // pred_region
      %75 = dma.done [#allocation11], 8192
    $region49: #{tpu_custom_call.1} parent=1 // pred_fallthru
      _
    // Predicated region
    $region50: #{tpu_custom_call.1} parent=1 // pred_check
      _
    $region51: #{tpu_custom_call.1} parent=1 // pred_check_branch
      %77 = sbr.rel target = $region53
    $region52: #{tpu_custom_call.1} parent=1 // pred_region
      %78 = sst [smem:[#allocation16]] [#allocation15]
      %79 = sst [smem:[#allocation17]] [#allocation14]
    $region53: #{tpu_custom_call.1} parent=1 // pred_fallthru
      _
    %81 = shalt.err (0)
    %s83 = sshll.u32 [#allocation2], 4
    %s84 = int_to_ptr.vmem [resolvable:$true] %s83
    %86 = dma.hbm_to_vmem [thread:$0]  %s9, 8192, %s84, [#allocation6]
    %s87 = scalar_lea.sflag [#allocation6], 1
    // Predicated region
    $region54: #{tpu_custom_call.1} parent=1 // pred_check
      _
    $region55: #{tpu_custom_call.1} parent=1 // pred_check_branch
      %89 = sbr.rel target = $region57
    $region56: #{tpu_custom_call.1} parent=1 // pred_region
      %90 = sst [smem:[#allocation16]] [#allocation19]
      %91 = sst [smem:[#allocation17]] [#allocation18]
    $region57: #{tpu_custom_call.1} parent=1 // pred_fallthru
      _
    %93 = shalt.err (0)
    %s95 = sshll.u32 [#allocation3], 4
    %s96 = int_to_ptr.vmem [resolvable:$true] %s95
    %98 = dma.hbm_to_vmem [thread:$0]  %s10, 8192, %s96, %s87
    %s99 = scalar_lea.sflag [#allocation6], 2
    // Predicated region
    $region58: #{tpu_custom_call.1} parent=1 // pred_check
      _
    $region59: #{tpu_custom_call.1} parent=1 // pred_check_branch
      %101 = sbr.rel target = $region61
    $region60: #{tpu_custom_call.1} parent=1 // pred_region
      %102 = sst [smem:[#allocation16]] [#allocation21]
      %103 = sst [smem:[#allocation17]] [#allocation20]
    $region61: #{tpu_custom_call.1} parent=1 // pred_fallthru
      _
    %105 = shalt.err (0)
    %s107 = sshll.u32 [#allocation4], 4
    %s108 = int_to_ptr.vmem [resolvable:$true] %s107
    %110 = dma.hbm_to_vmem [thread:$0]  %s11, 8192, %s108, %s99
    %s111 = scalar_lea.sflag [#allocation6], 3
    // Predicated region
    $region62: #{tpu_custom_call.1} parent=1 // pred_check
      _
    $region63: #{tpu_custom_call.1} parent=1 // pred_check_branch
      %113 = sbr.rel target = $region65
    $region64: #{tpu_custom_call.1} parent=1 // pred_region
      %114 = sst [smem:[#allocation16]] [#allocation23]
      %115 = sst [smem:[#allocation17]] [#allocation22]
    $region65: #{tpu_custom_call.1} parent=1 // pred_fallthru
      _
    %117 = shalt.err (0)
    %s119 = sshll.u32 [#allocation5], 4
    %s120 = int_to_ptr.vmem [resolvable:$true] %s119
    %122 = dma.hbm_to_vmem [thread:$0]  %s12, 4096, %s120, %s111
    %v123 = vld [vmem:[#allocation7] sm:$0xff]
    %v124 = vld [vmem:[#allocation10] sm:$0xff]
    %v125 = vld [vmem:[#allocation10 + $0x8] sm:$0xff]
    %v126 = vld [vmem:[#allocation10 + $0x10] sm:$0xff]
    %v127 = vld [vmem:[#allocation10 + $0x18] sm:$0xff]
    %v128 = vld [vmem:[#allocation10 + $0x20] sm:$0xff]
    %v129 = vld [vmem:[#allocation10 + $0x28] sm:$0xff]
    %v130 = vld [vmem:[#allocation10 + $0x30] sm:$0xff]
    %v131 = vld [vmem:[#allocation10 + $0x38] sm:$0xff]
    %v132 = vld [vmem:[#allocation10 + $0x40] sm:$0xff]
    %v133 = vld [vmem:[#allocation10 + $0x48] sm:$0xff]
    %v134 = vld [vmem:[#allocation10 + $0x50] sm:$0xff]
    %v135 = vld [vmem:[#allocation10 + $0x58] sm:$0xff]
    %v136 = vld [vmem:[#allocation10 + $0x60] sm:$0xff]
    %v137 = vld [vmem:[#allocation10 + $0x68] sm:$0xff]
    %v138 = vld [vmem:[#allocation10 + $0x70] sm:$0xff]
    %v139 = vld [vmem:[#allocation10 + $0x78] sm:$0xff]
    %v140 = vld [vmem:[#allocation10 + $0x80] sm:$0xff]
    %v141 = vld [vmem:[#allocation10 + $0x88] sm:$0xff]
    %v142 = vld [vmem:[#allocation10 + $0x90] sm:$0xff]
    %v143 = vld [vmem:[#allocation10 + $0x98] sm:$0xff]
    %v144 = vld [vmem:[#allocation10 + $0xa0] sm:$0xff]
    %v145 = vld [vmem:[#allocation10 + $0xa8] sm:$0xff]
    %v146 = vld [vmem:[#allocation10 + $0xb0] sm:$0xff]
    %v147 = vld [vmem:[#allocation10 + $0xb8] sm:$0xff]
    %v148 = vld [vmem:[#allocation10 + $0xc0] sm:$0xff]
    %v149 = vld [vmem:[#allocation10 + $0xc8] sm:$0xff]
    %v150 = vld [vmem:[#allocation10 + $0xd0] sm:$0xff]
    %v151 = vld [vmem:[#allocation10 + $0xd8] sm:$0xff]
    %v152 = vld [vmem:[#allocation10 + $0xe0] sm:$0xff]
    %v153 = vld [vmem:[#allocation10 + $0xe8] sm:$0xff]
    %v154 = vld [vmem:[#allocation10 + $0xf0] sm:$0xff]
    %v155 = vld [vmem:[#allocation10 + $0xf8] sm:$0xff]
    %vm156 = vcmask 523264
    %v158 = vsel %vm156, %v123, 0
    %160 = vmatprep.subr.mxu0 0.0
    %161 = vmatpush1.msra.mxu0 0.0
    %162 = vmatprep.subr.mxu0 0.0
    %163 = vmatpush1.msra.mxu0 0.0
    %164 = vmatprep.subr.mxu0 0.0
    %165 = vmatpush1.msra.mxu0 0.0
    %166 = vmatprep.subr.mxu0 0.0
    %167 = vmatpush1.msra.mxu0 0.0
    %168 = vmatprep.subr.mxu0 0.0
    %169 = vmatpush1.msra.mxu0 0.0
    %170 = vmatprep.subr.mxu0 0.0
    %171 = vmatpush1.msra.mxu0 0.0
    %172 = vmatprep.subr.mxu0 0.0
    %173 = vmatpush1.msra.mxu0 0.0
    %174 = vmatprep.subr.mxu0 0.0
    %175 = vmatpush1.msra.mxu0 0.0
    %176 = vmatprep.subr.mxu0 %v153
    %177 = vmatpush1.msra.mxu0 %v152
    %178 = vmatprep.subr.mxu0 %v149
    %179 = vmatpush1.msra.mxu0 %v148
    %180 = vmatprep.subr.mxu0 %v145
    %181 = vmatpush1.msra.mxu0 %v144
    %182 = vmatprep.subr.mxu0 %v141
    %183 = vmatpush1.msra.mxu0 %v140
    %184 = vmatprep.subr.mxu0 %v137
    %185 = vmatpush1.msra.mxu0 %v136
    %186 = vmatprep.subr.mxu0 %v133
    %187 = vmatpush1.msra.mxu0 %v132
    %188 = vmatprep.subr.mxu0 %v129
    %189 = vmatpush1.msra.mxu0 %v128
    %190 = vmatprep.subr.mxu0 %v125
    %191 = vmatpush1.msra.mxu0 %v124
    %192 = vmatprep.subr.mxu0 0.0
    %193 = vmatpush2.msra.mxu0 0.0
    %194 = vmatprep.subr.mxu0 0.0
    %195 = vmatpush2.msra.mxu0 0.0
    %196 = vmatprep.subr.mxu0 0.0
    %197 = vmatpush2.msra.mxu0 0.0
    %198 = vmatprep.subr.mxu0 0.0
    %199 = vmatpush2.msra.mxu0 0.0
    %200 = vmatprep.subr.mxu0 0.0
    %201 = vmatpush2.msra.mxu0 0.0
    %202 = vmatprep.subr.mxu0 0.0
    %203 = vmatpush2.msra.mxu0 0.0
    %204 = vmatprep.subr.mxu0 0.0
    %205 = vmatpush2.msra.mxu0 0.0
    %206 = vmatprep.subr.mxu0 0.0
    %207 = vmatpush2.msra.mxu0 0.0
    %208 = vmatprep.subr.mxu0 0.0
    %209 = vmatpush2.msra.mxu0 0.0
    %210 = vmatprep.subr.mxu0 0.0
    %211 = vmatpush2.msra.mxu0 0.0
    %212 = vmatprep.subr.mxu0 0.0
    %213 = vmatpush2.msra.mxu0 0.0
    %214 = vmatprep.subr.mxu0 0.0
    %215 = vmatpush2.msra.mxu0 0.0
    %216 = vmatprep.subr.mxu0 0.0
    %217 = vmatpush2.msra.mxu0 0.0
    %218 = vmatprep.subr.mxu0 0.0
    %219 = vmatpush2.msra.mxu0 0.0
    %220 = vmatprep.subr.mxu0 0.0
    %221 = vmatpush2.msra.mxu0 0.0
    %222 = vmatprep.subr.mxu0 0.0
    %223 = vmatpush2.msra.mxu0 0.0
    %224 = vmatprep.mubr.f32.mxu0 0.0
    %225 = vmatmul.mubr.f32.gmra.mxu0 %v158
    %v226 = vpop.f32.mrf.mxu0
    %v227 = vadd.f32 0.0, %v226
    %v228 = vpop.f32.mrf.mxu0
    %v229 = vadd.f32 0.0, %v228
    %230 = vdwg.mxu0
    %231 = vmatprep.subr.mxu0 0.0
    %232 = vmatpush1.msra.mxu0 0.0
    %233 = vmatprep.subr.mxu0 0.0
    %234 = vmatpush1.msra.mxu0 0.0
    %235 = vmatprep.subr.mxu0 0.0
    %236 = vmatpush1.msra.mxu0 0.0
    %237 = vmatprep.subr.mxu0 0.0
    %238 = vmatpush1.msra.mxu0 0.0
    %239 = vmatprep.subr.mxu0 0.0
    %240 = vmatpush1.msra.mxu0 0.0
    %241 = vmatprep.subr.mxu0 0.0
    %242 = vmatpush1.msra.mxu0 0.0
    %243 = vmatprep.subr.mxu0 0.0
    %244 = vmatpush1.msra.mxu0 0.0
    %245 = vmatprep.subr.mxu0 0.0
    %246 = vmatpush1.msra.mxu0 0.0
    %247 = vmatprep.subr.mxu0 %v155
    %248 = vmatpush1.msra.mxu0 %v154
    %249 = vmatprep.subr.mxu0 %v151
    %250 = vmatpush1.msra.mxu0 %v150
    %251 = vmatprep.subr.mxu0 %v147
    %252 = vmatpush1.msra.mxu0 %v146
    %253 = vmatprep.subr.mxu0 %v143
    %254 = vmatpush1.msra.mxu0 %v142
    %255 = vmatprep.subr.mxu0 %v139
    %256 = vmatpush1.msra.mxu0 %v138
    %257 = vmatprep.subr.mxu0 %v135
    %258 = vmatpush1.msra.mxu0 %v134
    %259 = vmatprep.subr.mxu0 %v131
    %260 = vmatpush1.msra.mxu0 %v130
    %261 = vmatprep.subr.mxu0 %v127
    %262 = vmatpush1.msra.mxu0 %v126
    %263 = vmatprep.subr.mxu0 0.0
    %264 = vmatpush2.msra.mxu0 0.0
    %265 = vmatprep.subr.mxu0 0.0
    %266 = vmatpush2.msra.mxu0 0.0
    %267 = vmatprep.subr.mxu0 0.0
    %268 = vmatpush2.msra.mxu0 0.0
    %269 = vmatprep.subr.mxu0 0.0
    %270 = vmatpush2.msra.mxu0 0.0
    %271 = vmatprep.subr.mxu0 0.0
    %272 = vmatpush2.msra.mxu0 0.0
    %273 = vmatprep.subr.mxu0 0.0
    %274 = vmatpush2.msra.mxu0 0.0
    %275 = vmatprep.subr.mxu0 0.0
    %276 = vmatpush2.msra.mxu0 0.0
    %277 = vmatprep.subr.mxu0 0.0
    %278 = vmatpush2.msra.mxu0 0.0
    %279 = vmatprep.subr.mxu0 0.0
    %280 = vmatpush2.msra.mxu0 0.0
    %281 = vmatprep.subr.mxu0 0.0
    %282 = vmatpush2.msra.mxu0 0.0
    %283 = vmatprep.subr.mxu0 0.0
    %284 = vmatpush2.msra.mxu0 0.0
    %285 = vmatprep.subr.mxu0 0.0
    %286 = vmatpush2.msra.mxu0 0.0
    %287 = vmatprep.subr.mxu0 0.0
    %288 = vmatpush2.msra.mxu0 0.0
    %289 = vmatprep.subr.mxu0 0.0
    %290 = vmatpush2.msra.mxu0 0.0
    %291 = vmatprep.subr.mxu0 0.0
    %292 = vmatpush2.msra.mxu0 0.0
    %293 = vmatprep.subr.mxu0 0.0
    %294 = vmatpush2.msra.mxu0 0.0
    %295 = vmatprep.mubr.f32.mxu0 0.0
    %296 = vmatmul.mubr.f32.gmra.mxu0 %v158
    %v297 = vpop.f32.mrf.mxu0
    %v298 = vadd.f32 0.0, %v297
    %v299 = vpop.f32.mrf.mxu0
    %v300 = vadd.f32 0.0, %v299
    %301 = vdwg.mxu0
    %v302 = vld [vmem:[%s2] sm:$0x3]
    %v304 = vlaneseq
    %v305 = vshrl.u32 %v304, 7
    %v306 = vsub.s32 0, %v305
    %v307 = vrot.slane %v302, %v306
    %v308 = vlaneseq
    %v309 = vshrl.u32 %v308, 7
    %v310 = vsub.s32 1, %v309
    %v311 = vrot.slane %v302, %v310
    %v314 = vadd.f32 %v227, %v307
    %v315 = vadd.f32 %v229, %v311
    %v316 = vmul.f32 %v314, 0.01
    %v317 = vmul.f32 %v315, 0.01
    %v318 = vmax.f32 %v314, %v316
    %v319 = vmax.f32 %v315, %v317
    %v320 = vld [vmem:[#allocation12] sm:$0xff]
    %v321 = vld [vmem:[#allocation12 + $0x8] sm:$0xff]
    %v322 = vld [vmem:[#allocation12 + $0x10] sm:$0xff]
    %v323 = vld [vmem:[#allocation12 + $0x18] sm:$0xff]
    %v324 = vld [vmem:[#allocation12 + $0x20] sm:$0xff]
    %v325 = vld [vmem:[#allocation12 + $0x28] sm:$0xff]
    %v326 = vld [vmem:[#allocation12 + $0x30] sm:$0xff]
    %v327 = vld [vmem:[#allocation12 + $0x38] sm:$0xff]
    %v328 = vld [vmem:[#allocation12 + $0x40] sm:$0xff]
    %v329 = vld [vmem:[#allocation12 + $0x48] sm:$0xff]
    %v330 = vld [vmem:[#allocation12 + $0x50] sm:$0xff]
    %v331 = vld [vmem:[#allocation12 + $0x58] sm:$0xff]
    %v332 = vld [vmem:[#allocation12 + $0x60] sm:$0xff]
    %v333 = vld [vmem:[#allocation12 + $0x68] sm:$0xff]
    %v334 = vld [vmem:[#allocation12 + $0x70] sm:$0xff]
    %v335 = vld [vmem:[#allocation12 + $0x78] sm:$0xff]
    %v336 = vld [vmem:[#allocation12 + $0x80] sm:$0xff]
    %v337 = vld [vmem:[#allocation12 + $0x88] sm:$0xff]
    %v338 = vld [vmem:[#allocation12 + $0x90] sm:$0xff]
    %v339 = vld [vmem:[#allocation12 + $0x98] sm:$0xff]
    %v340 = vld [vmem:[#allocation12 + $0xa0] sm:$0xff]
    %v341 = vld [vmem:[#allocation12 + $0xa8] sm:$0xff]
    %v342 = vld [vmem:[#allocation12 + $0xb0] sm:$0xff]
    %v343 = vld [vmem:[#allocation12 + $0xb8] sm:$0xff]
    %v344 = vld [vmem:[#allocation12 + $0xc0] sm:$0xff]
    %v345 = vld [vmem:[#allocation12 + $0xc8] sm:$0xff]
    %v346 = vld [vmem:[#allocation12 + $0xd0] sm:$0xff]
    %v347 = vld [vmem:[#allocation12 + $0xd8] sm:$0xff]
    %v348 = vld [vmem:[#allocation12 + $0xe0] sm:$0xff]
    %v349 = vld [vmem:[#allocation12 + $0xe8] sm:$0xff]
    %v350 = vld [vmem:[#allocation12 + $0xf0] sm:$0xff]
    %v351 = vld [vmem:[#allocation12 + $0xf8] sm:$0xff]
    %v352 = vld [vmem:[#allocation12 + $0x100] sm:$0xff]
    %v353 = vld [vmem:[#allocation12 + $0x108] sm:$0xff]
    %v354 = vld [vmem:[#allocation12 + $0x110] sm:$0xff]
    %v355 = vld [vmem:[#allocation12 + $0x118] sm:$0xff]
    %v356 = vld [vmem:[#allocation12 + $0x120] sm:$0xff]
    %v357 = vld [vmem:[#allocation12 + $0x128] sm:$0xff]
    %v358 = vld [vmem:[#allocation12 + $0x130] sm:$0xff]
    %v359 = vld [vmem:[#allocation12 + $0x138] sm:$0xff]
    %v360 = vld [vmem:[#allocation12 + $0x140] sm:$0xff]
    %v361 = vld [vmem:[#allocation12 + $0x148] sm:$0xff]
    %v362 = vld [vmem:[#allocation12 + $0x150] sm:$0xff]
    %v363 = vld [vmem:[#allocation12 + $0x158] sm:$0xff]
    %v364 = vld [vmem:[#allocation12 + $0x160] sm:$0xff]
    %v365 = vld [vmem:[#allocation12 + $0x168] sm:$0xff]
    %v366 = vld [vmem:[#allocation12 + $0x170] sm:$0xff]
    %v367 = vld [vmem:[#allocation12 + $0x178] sm:$0xff]
    %v368 = vld [vmem:[#allocation12 + $0x180] sm:$0xff]
    %v369 = vld [vmem:[#allocation12 + $0x188] sm:$0xff]
    %v370 = vld [vmem:[#allocation12 + $0x190] sm:$0xff]
    %v371 = vld [vmem:[#allocation12 + $0x198] sm:$0xff]
    %v372 = vld [vmem:[#allocation12 + $0x1a0] sm:$0xff]
    %v373 = vld [vmem:[#allocation12 + $0x1a8] sm:$0xff]
    %v374 = vld [vmem:[#allocation12 + $0x1b0] sm:$0xff]
    %v375 = vld [vmem:[#allocation12 + $0x1b8] sm:$0xff]
    %v376 = vld [vmem:[#allocation12 + $0x1c0] sm:$0xff]
    %v377 = vld [vmem:[#allocation12 + $0x1c8] sm:$0xff]
    %v378 = vld [vmem:[#allocation12 + $0x1d0] sm:$0xff]
    %v379 = vld [vmem:[#allocation12 + $0x1d8] sm:$0xff]
    %v380 = vld [vmem:[#allocation12 + $0x1e0] sm:$0xff]
    %v381 = vld [vmem:[#allocation12 + $0x1e8] sm:$0xff]
    %v382 = vld [vmem:[#allocation12 + $0x1f0] sm:$0xff]
    %v383 = vld [vmem:[#allocation12 + $0x1f8] sm:$0xff]
    %384 = vmatprep.subr.mxu0 %v351
    %385 = vmatpush1.msra.mxu0 %v350
    %386 = vmatprep.subr.mxu0 %v349
    %387 = vmatpush1.msra.mxu0 %v348
    %388 = vmatprep.subr.mxu0 %v347
    %389 = vmatpush1.msra.mxu0 %v346
    %390 = vmatprep.subr.mxu0 %v345
    %391 = vmatpush1.msra.mxu0 %v344
    %392 = vmatprep.subr.mxu0 %v343
    %393 = vmatpush1.msra.mxu0 %v342
    %394 = vmatprep.subr.mxu0 %v341
    %395 = vmatpush1.msra.mxu0 %v340
    %396 = vmatprep.subr.mxu0 %v339
    %397 = vmatpush1.msra.mxu0 %v338
    %398 = vmatprep.subr.mxu0 %v337
    %399 = vmatpush1.msra.mxu0 %v336
    %400 = vmatprep.subr.mxu0 %v335
    %401 = vmatpush1.msra.mxu0 %v334
    %402 = vmatprep.subr.mxu0 %v333
    %403 = vmatpush1.msra.mxu0 %v332
    %404 = vmatprep.subr.mxu0 %v331
    %405 = vmatpush1.msra.mxu0 %v330
    %406 = vmatprep.subr.mxu0 %v329
    %407 = vmatpush1.msra.mxu0 %v328
    %408 = vmatprep.subr.mxu0 %v327
    %409 = vmatpush1.msra.mxu0 %v326
    %410 = vmatprep.subr.mxu0 %v325
    %411 = vmatpush1.msra.mxu0 %v324
    %412 = vmatprep.subr.mxu0 %v323
    %413 = vmatpush1.msra.mxu0 %v322
    %414 = vmatprep.subr.mxu0 %v321
    %415 = vmatpush1.msra.mxu0 %v320
    %416 = vmatprep.subr.mxu0 %v383
    %417 = vmatpush2.msra.mxu0 %v382
    %418 = vmatprep.subr.mxu0 %v381
    %419 = vmatpush2.msra.mxu0 %v380
    %420 = vmatprep.subr.mxu0 %v379
    %421 = vmatpush2.msra.mxu0 %v378
    %422 = vmatprep.subr.mxu0 %v377
    %423 = vmatpush2.msra.mxu0 %v376
    %424 = vmatprep.subr.mxu0 %v375
    %425 = vmatpush2.msra.mxu0 %v374
    %426 = vmatprep.subr.mxu0 %v373
    %427 = vmatpush2.msra.mxu0 %v372
    %428 = vmatprep.subr.mxu0 %v371
    %429 = vmatpush2.msra.mxu0 %v370
    %430 = vmatprep.subr.mxu0 %v369
    %431 = vmatpush2.msra.mxu0 %v368
    %432 = vmatprep.subr.mxu0 %v367
    %433 = vmatpush2.msra.mxu0 %v366
    %434 = vmatprep.subr.mxu0 %v365
    %435 = vmatpush2.msra.mxu0 %v364
    %436 = vmatprep.subr.mxu0 %v363
    %437 = vmatpush2.msra.mxu0 %v362
    %438 = vmatprep.subr.mxu0 %v361
    %439 = vmatpush2.msra.mxu0 %v360
    %440 = vmatprep.subr.mxu0 %v359
    %441 = vmatpush2.msra.mxu0 %v358
    %442 = vmatprep.subr.mxu0 %v357
    %443 = vmatpush2.msra.mxu0 %v356
    %444 = vmatprep.subr.mxu0 %v355
    %445 = vmatpush2.msra.mxu0 %v354
    %446 = vmatprep.subr.mxu0 %v353
    %447 = vmatpush2.msra.mxu0 %v352
    %448 = vmatprep.mubr.f32.mxu0 %v319
    %449 = vmatmul.mubr.f32.gmra.mxu0 %v318
    %v450 = vpop.f32.mrf.mxu0
    %v451 = vadd.f32 %v298, %v450
    %v452 = vpop.f32.mrf.mxu0
    %v453 = vadd.f32 %v300, %v452
    %454 = vdwg.mxu0
    %v455 = vld [vmem:[%s4] sm:$0x3]
    %v457 = vlaneseq
    %v458 = vshrl.u32 %v457, 7
    %v459 = vsub.s32 0, %v458
    %v460 = vrot.slane %v455, %v459
    %v461 = vlaneseq
    %v462 = vshrl.u32 %v461, 7
    %v463 = vsub.s32 1, %v462
    %v464 = vrot.slane %v455, %v463
    %v467 = vadd.f32 %v451, %v460
    %v468 = vadd.f32 %v453, %v464
    %v469 = vmul.f32 %v467, 0.01
    %v470 = vmul.f32 %v468, 0.01
    %v471 = vmax.f32 %v467, %v469
    %v472 = vmax.f32 %v468, %v470
    %s473 = smul.u32 8, 32
    %s474 = smul.u32 %s473, 2
    %s475 = sshll.u32 %s474, 4
    %476 = dma.done [#allocation6], %s475
    %v477 = vld [vmem:[#allocation2] sm:$0xff]
    %v478 = vld [vmem:[#allocation2 + $0x8] sm:$0xff]
    %v479 = vld [vmem:[#allocation2 + $0x10] sm:$0xff]
    %v480 = vld [vmem:[#allocation2 + $0x18] sm:$0xff]
    %v481 = vld [vmem:[#allocation2 + $0x20] sm:$0xff]
    %v482 = vld [vmem:[#allocation2 + $0x28] sm:$0xff]
    %v483 = vld [vmem:[#allocation2 + $0x30] sm:$0xff]
    %v484 = vld [vmem:[#allocation2 + $0x38] sm:$0xff]
    %v485 = vld [vmem:[#allocation2 + $0x40] sm:$0xff]
    %v486 = vld [vmem:[#allocation2 + $0x48] sm:$0xff]
    %v487 = vld [vmem:[#allocation2 + $0x50] sm:$0xff]
    %v488 = vld [vmem:[#allocation2 + $0x58] sm:$0xff]
    %v489 = vld [vmem:[#allocation2 + $0x60] sm:$0xff]
    %v490 = vld [vmem:[#allocation2 + $0x68] sm:$0xff]
    %v491 = vld [vmem:[#allocation2 + $0x70] sm:$0xff]
    %v492 = vld [vmem:[#allocation2 + $0x78] sm:$0xff]
    %v493 = vld [vmem:[#allocation2 + $0x80] sm:$0xff]
    %v494 = vld [vmem:[#allocation2 + $0x88] sm:$0xff]
    %v495 = vld [vmem:[#allocation2 + $0x90] sm:$0xff]
    %v496 = vld [vmem:[#allocation2 + $0x98] sm:$0xff]
    %v497 = vld [vmem:[#allocation2 + $0xa0] sm:$0xff]
    %v498 = vld [vmem:[#allocation2 + $0xa8] sm:$0xff]
    %v499 = vld [vmem:[#allocation2 + $0xb0] sm:$0xff]
    %v500 = vld [vmem:[#allocation2 + $0xb8] sm:$0xff]
    %v501 = vld [vmem:[#allocation2 + $0xc0] sm:$0xff]
    %v502 = vld [vmem:[#allocation2 + $0xc8] sm:$0xff]
    %v503 = vld [vmem:[#allocation2 + $0xd0] sm:$0xff]
    %v504 = vld [vmem:[#allocation2 + $0xd8] sm:$0xff]
    %v505 = vld [vmem:[#allocation2 + $0xe0] sm:$0xff]
    %v506 = vld [vmem:[#allocation2 + $0xe8] sm:$0xff]
    %v507 = vld [vmem:[#allocation2 + $0xf0] sm:$0xff]
    %v508 = vld [vmem:[#allocation2 + $0xf8] sm:$0xff]
    %v509 = vld [vmem:[#allocation2 + $0x100] sm:$0xff]
    %v510 = vld [vmem:[#allocation2 + $0x108] sm:$0xff]
    %v511 = vld [vmem:[#allocation2 + $0x110] sm:$0xff]
    %v512 = vld [vmem:[#allocation2 + $0x118] sm:$0xff]
    %v513 = vld [vmem:[#allocation2 + $0x120] sm:$0xff]
    %v514 = vld [vmem:[#allocation2 + $0x128] sm:$0xff]
    %v515 = vld [vmem:[#allocation2 + $0x130] sm:$0xff]
    %v516 = vld [vmem:[#allocation2 + $0x138] sm:$0xff]
    %v517 = vld [vmem:[#allocation2 + $0x140] sm:$0xff]
    %v518 = vld [vmem:[#allocation2 + $0x148] sm:$0xff]
    %v519 = vld [vmem:[#allocation2 + $0x150] sm:$0xff]
    %v520 = vld [vmem:[#allocation2 + $0x158] sm:$0xff]
    %v521 = vld [vmem:[#allocation2 + $0x160] sm:$0xff]
    %v522 = vld [vmem:[#allocation2 + $0x168] sm:$0xff]
    %v523 = vld [vmem:[#allocation2 + $0x170] sm:$0xff]
    %v524 = vld [vmem:[#allocation2 + $0x178] sm:$0xff]
    %v525 = vld [vmem:[#allocation2 + $0x180] sm:$0xff]
    %v526 = vld [vmem:[#allocation2 + $0x188] sm:$0xff]
    %v527 = vld [vmem:[#allocation2 + $0x190] sm:$0xff]
    %v528 = vld [vmem:[#allocation2 + $0x198] sm:$0xff]
    %v529 = vld [vmem:[#allocation2 + $0x1a0] sm:$0xff]
    %v530 = vld [vmem:[#allocation2 + $0x1a8] sm:$0xff]
    %v531 = vld [vmem:[#allocation2 + $0x1b0] sm:$0xff]
    %v532 = vld [vmem:[#allocation2 + $0x1b8] sm:$0xff]
    %v533 = vld [vmem:[#allocation2 + $0x1c0] sm:$0xff]
    %v534 = vld [vmem:[#allocation2 + $0x1c8] sm:$0xff]
    %v535 = vld [vmem:[#allocation2 + $0x1d0] sm:$0xff]
    %v536 = vld [vmem:[#allocation2 + $0x1d8] sm:$0xff]
    %v537 = vld [vmem:[#allocation2 + $0x1e0] sm:$0xff]
    %v538 = vld [vmem:[#allocation2 + $0x1e8] sm:$0xff]
    %v539 = vld [vmem:[#allocation2 + $0x1f0] sm:$0xff]
    %v540 = vld [vmem:[#allocation2 + $0x1f8] sm:$0xff]
    %v541 = vld [vmem:[%s5] sm:$0x3]
    %v543 = vlaneseq
    %v544 = vshrl.u32 %v543, 7
    %v545 = vsub.s32 0, %v544
    %v546 = vrot.slane %v541, %v545
    %v547 = vlaneseq
    %v548 = vshrl.u32 %v547, 7
    %v549 = vsub.s32 1, %v548
    %v550 = vrot.slane %v541, %v549
    %553 = vmatprep.subr.mxu0 %v508
    %554 = vmatpush1.msra.mxu0 %v507
    %555 = vmatprep.subr.mxu0 %v506
    %556 = vmatpush1.msra.mxu0 %v505
    %557 = vmatprep.subr.mxu0 %v504
    %558 = vmatpush1.msra.mxu0 %v503
    %559 = vmatprep.subr.mxu0 %v502
    %560 = vmatpush1.msra.mxu0 %v501
    %561 = vmatprep.subr.mxu0 %v500
    %562 = vmatpush1.msra.mxu0 %v499
    %563 = vmatprep.subr.mxu0 %v498
    %564 = vmatpush1.msra.mxu0 %v497
    %565 = vmatprep.subr.mxu0 %v496
    %566 = vmatpush1.msra.mxu0 %v495
    %567 = vmatprep.subr.mxu0 %v494
    %568 = vmatpush1.msra.mxu0 %v493
    %569 = vmatprep.subr.mxu0 %v492
    %570 = vmatpush1.msra.mxu0 %v491
    %571 = vmatprep.subr.mxu0 %v490
    %572 = vmatpush1.msra.mxu0 %v489
    %573 = vmatprep.subr.mxu0 %v488
    %574 = vmatpush1.msra.mxu0 %v487
    %575 = vmatprep.subr.mxu0 %v486
    %576 = vmatpush1.msra.mxu0 %v485
    %577 = vmatprep.subr.mxu0 %v484
    %578 = vmatpush1.msra.mxu0 %v483
    %579 = vmatprep.subr.mxu0 %v482
    %580 = vmatpush1.msra.mxu0 %v481
    %581 = vmatprep.subr.mxu0 %v480
    %582 = vmatpush1.msra.mxu0 %v479
    %583 = vmatprep.subr.mxu0 %v478
    %584 = vmatpush1.msra.mxu0 %v477
    %585 = vmatprep.subr.mxu0 %v540
    %586 = vmatpush2.msra.mxu0 %v539
    %587 = vmatprep.subr.mxu0 %v538
    %588 = vmatpush2.msra.mxu0 %v537
    %589 = vmatprep.subr.mxu0 %v536
    %590 = vmatpush2.msra.mxu0 %v535
    %591 = vmatprep.subr.mxu0 %v534
    %592 = vmatpush2.msra.mxu0 %v533
    %593 = vmatprep.subr.mxu0 %v532
    %594 = vmatpush2.msra.mxu0 %v531
    %595 = vmatprep.subr.mxu0 %v530
    %596 = vmatpush2.msra.mxu0 %v529
    %597 = vmatprep.subr.mxu0 %v528
    %598 = vmatpush2.msra.mxu0 %v527
    %599 = vmatprep.subr.mxu0 %v526
    %600 = vmatpush2.msra.mxu0 %v525
    %601 = vmatprep.subr.mxu0 %v524
    %602 = vmatpush2.msra.mxu0 %v523
    %603 = vmatprep.subr.mxu0 %v522
    %604 = vmatpush2.msra.mxu0 %v521
    %605 = vmatprep.subr.mxu0 %v520
    %606 = vmatpush2.msra.mxu0 %v519
    %607 = vmatprep.subr.mxu0 %v518
    %608 = vmatpush2.msra.mxu0 %v517
    %609 = vmatprep.subr.mxu0 %v516
    %610 = vmatpush2.msra.mxu0 %v515
    %611 = vmatprep.subr.mxu0 %v514
    %612 = vmatpush2.msra.mxu0 %v513
    %613 = vmatprep.subr.mxu0 %v512
    %614 = vmatpush2.msra.mxu0 %v511
    %615 = vmatprep.subr.mxu0 %v510
    %616 = vmatpush2.msra.mxu0 %v509
    %617 = vmatprep.mubr.f32.mxu0 %v472
    %618 = vmatmul.mubr.f32.gmra.mxu0 %v471
    %v619 = vpop.f32.mrf.mxu0
    %v620 = vadd.f32 %v546, %v619
    %v621 = vpop.f32.mrf.mxu0
    %v622 = vadd.f32 %v550, %v621
    %623 = vdwg.mxu0
    %v624 = vmul.f32 %v620, 0.01
    %v625 = vmul.f32 %v622, 0.01
    %v626 = vmax.f32 %v620, %v624
    %v627 = vmax.f32 %v622, %v625
    %s628 = sshll.u32 %s474, 4
    %629 = dma.done %s87, %s628
    %v630 = vld [vmem:[#allocation3] sm:$0xff]
    %v631 = vld [vmem:[#allocation3 + $0x8] sm:$0xff]
    %v632 = vld [vmem:[#allocation3 + $0x10] sm:$0xff]
    %v633 = vld [vmem:[#allocation3 + $0x18] sm:$0xff]
    %v634 = vld [vmem:[#allocation3 + $0x20] sm:$0xff]
    %v635 = vld [vmem:[#allocation3 + $0x28] sm:$0xff]
    %v636 = vld [vmem:[#allocation3 + $0x30] sm:$0xff]
    %v637 = vld [vmem:[#allocation3 + $0x38] sm:$0xff]
    %v638 = vld [vmem:[#allocation3 + $0x40] sm:$0xff]
    %v639 = vld [vmem:[#allocation3 + $0x48] sm:$0xff]
    %v640 = vld [vmem:[#allocation3 + $0x50] sm:$0xff]
    %v641 = vld [vmem:[#allocation3 + $0x58] sm:$0xff]
    %v642 = vld [vmem:[#allocation3 + $0x60] sm:$0xff]
    %v643 = vld [vmem:[#allocation3 + $0x68] sm:$0xff]
    %v644 = vld [vmem:[#allocation3 + $0x70] sm:$0xff]
    %v645 = vld [vmem:[#allocation3 + $0x78] sm:$0xff]
    %v646 = vld [vmem:[#allocation3 + $0x80] sm:$0xff]
    %v647 = vld [vmem:[#allocation3 + $0x88] sm:$0xff]
    %v648 = vld [vmem:[#allocation3 + $0x90] sm:$0xff]
    %v649 = vld [vmem:[#allocation3 + $0x98] sm:$0xff]
    %v650 = vld [vmem:[#allocation3 + $0xa0] sm:$0xff]
    %v651 = vld [vmem:[#allocation3 + $0xa8] sm:$0xff]
    %v652 = vld [vmem:[#allocation3 + $0xb0] sm:$0xff]
    %v653 = vld [vmem:[#allocation3 + $0xb8] sm:$0xff]
    %v654 = vld [vmem:[#allocation3 + $0xc0] sm:$0xff]
    %v655 = vld [vmem:[#allocation3 + $0xc8] sm:$0xff]
    %v656 = vld [vmem:[#allocation3 + $0xd0] sm:$0xff]
    %v657 = vld [vmem:[#allocation3 + $0xd8] sm:$0xff]
    %v658 = vld [vmem:[#allocation3 + $0xe0] sm:$0xff]
    %v659 = vld [vmem:[#allocation3 + $0xe8] sm:$0xff]
    %v660 = vld [vmem:[#allocation3 + $0xf0] sm:$0xff]
    %v661 = vld [vmem:[#allocation3 + $0xf8] sm:$0xff]
    %v662 = vld [vmem:[#allocation3 + $0x100] sm:$0xff]
    %v663 = vld [vmem:[#allocation3 + $0x108] sm:$0xff]
    %v664 = vld [vmem:[#allocation3 + $0x110] sm:$0xff]
    %v665 = vld [vmem:[#allocation3 + $0x118] sm:$0xff]
    %v666 = vld [vmem:[#allocation3 + $0x120] sm:$0xff]
    %v667 = vld [vmem:[#allocation3 + $0x128] sm:$0xff]
    %v668 = vld [vmem:[#allocation3 + $0x130] sm:$0xff]
    %v669 = vld [vmem:[#allocation3 + $0x138] sm:$0xff]
    %v670 = vld [vmem:[#allocation3 + $0x140] sm:$0xff]
    %v671 = vld [vmem:[#allocation3 + $0x148] sm:$0xff]
    %v672 = vld [vmem:[#allocation3 + $0x150] sm:$0xff]
    %v673 = vld [vmem:[#allocation3 + $0x158] sm:$0xff]
    %v674 = vld [vmem:[#allocation3 + $0x160] sm:$0xff]
    %v675 = vld [vmem:[#allocation3 + $0x168] sm:$0xff]
    %v676 = vld [vmem:[#allocation3 + $0x170] sm:$0xff]
    %v677 = vld [vmem:[#allocation3 + $0x178] sm:$0xff]
    %v678 = vld [vmem:[#allocation3 + $0x180] sm:$0xff]
    %v679 = vld [vmem:[#allocation3 + $0x188] sm:$0xff]
    %v680 = vld [vmem:[#allocation3 + $0x190] sm:$0xff]
    %v681 = vld [vmem:[#allocation3 + $0x198] sm:$0xff]
    %v682 = vld [vmem:[#allocation3 + $0x1a0] sm:$0xff]
    %v683 = vld [vmem:[#allocation3 + $0x1a8] sm:$0xff]
    %v684 = vld [vmem:[#allocation3 + $0x1b0] sm:$0xff]
    %v685 = vld [vmem:[#allocation3 + $0x1b8] sm:$0xff]
    %v686 = vld [vmem:[#allocation3 + $0x1c0] sm:$0xff]
    %v687 = vld [vmem:[#allocation3 + $0x1c8] sm:$0xff]
    %v688 = vld [vmem:[#allocation3 + $0x1d0] sm:$0xff]
    %v689 = vld [vmem:[#allocation3 + $0x1d8] sm:$0xff]
    %v690 = vld [vmem:[#allocation3 + $0x1e0] sm:$0xff]
    %v691 = vld [vmem:[#allocation3 + $0x1e8] sm:$0xff]
    %v692 = vld [vmem:[#allocation3 + $0x1f0] sm:$0xff]
    %v693 = vld [vmem:[#allocation3 + $0x1f8] sm:$0xff]
    %v694 = vld [vmem:[%s6] sm:$0x3]
    %v696 = vlaneseq
    %v697 = vshrl.u32 %v696, 7
    %v698 = vsub.s32 0, %v697
    %v699 = vrot.slane %v694, %v698
    %v700 = vlaneseq
    %v701 = vshrl.u32 %v700, 7
    %v702 = vsub.s32 1, %v701
    %v703 = vrot.slane %v694, %v702
    %706 = vmatprep.subr.mxu0 %v661
    %707 = vmatpush1.msra.mxu0 %v660
    %708 = vmatprep.subr.mxu0 %v659
    %709 = vmatpush1.msra.mxu0 %v658
    %710 = vmatprep.subr.mxu0 %v657
    %711 = vmatpush1.msra.mxu0 %v656
    %712 = vmatprep.subr.mxu0 %v655
    %713 = vmatpush1.msra.mxu0 %v654
    %714 = vmatprep.subr.mxu0 %v653
    %715 = vmatpush1.msra.mxu0 %v652
    %716 = vmatprep.subr.mxu0 %v651
    %717 = vmatpush1.msra.mxu0 %v650
    %718 = vmatprep.subr.mxu0 %v649
    %719 = vmatpush1.msra.mxu0 %v648
    %720 = vmatprep.subr.mxu0 %v647
    %721 = vmatpush1.msra.mxu0 %v646
    %722 = vmatprep.subr.mxu0 %v645
    %723 = vmatpush1.msra.mxu0 %v644
    %724 = vmatprep.subr.mxu0 %v643
    %725 = vmatpush1.msra.mxu0 %v642
    %726 = vmatprep.subr.mxu0 %v641
    %727 = vmatpush1.msra.mxu0 %v640
    %728 = vmatprep.subr.mxu0 %v639
    %729 = vmatpush1.msra.mxu0 %v638
    %730 = vmatprep.subr.mxu0 %v637
    %731 = vmatpush1.msra.mxu0 %v636
    %732 = vmatprep.subr.mxu0 %v635
    %733 = vmatpush1.msra.mxu0 %v634
    %734 = vmatprep.subr.mxu0 %v633
    %735 = vmatpush1.msra.mxu0 %v632
    %736 = vmatprep.subr.mxu0 %v631
    %737 = vmatpush1.msra.mxu0 %v630
    %738 = vmatprep.subr.mxu0 %v693
    %739 = vmatpush2.msra.mxu0 %v692
    %740 = vmatprep.subr.mxu0 %v691
    %741 = vmatpush2.msra.mxu0 %v690
    %742 = vmatprep.subr.mxu0 %v689
    %743 = vmatpush2.msra.mxu0 %v688
    %744 = vmatprep.subr.mxu0 %v687
    %745 = vmatpush2.msra.mxu0 %v686
    %746 = vmatprep.subr.mxu0 %v685
    %747 = vmatpush2.msra.mxu0 %v684
    %748 = vmatprep.subr.mxu0 %v683
    %749 = vmatpush2.msra.mxu0 %v682
    %750 = vmatprep.subr.mxu0 %v681
    %751 = vmatpush2.msra.mxu0 %v680
    %752 = vmatprep.subr.mxu0 %v679
    %753 = vmatpush2.msra.mxu0 %v678
    %754 = vmatprep.subr.mxu0 %v677
    %755 = vmatpush2.msra.mxu0 %v676
    %756 = vmatprep.subr.mxu0 %v675
    %757 = vmatpush2.msra.mxu0 %v674
    %758 = vmatprep.subr.mxu0 %v673
    %759 = vmatpush2.msra.mxu0 %v672
    %760 = vmatprep.subr.mxu0 %v671
    %761 = vmatpush2.msra.mxu0 %v670
    %762 = vmatprep.subr.mxu0 %v669
    %763 = vmatpush2.msra.mxu0 %v668
    %764 = vmatprep.subr.mxu0 %v667
    %765 = vmatpush2.msra.mxu0 %v666
    %766 = vmatprep.subr.mxu0 %v665
    %767 = vmatpush2.msra.mxu0 %v664
    %768 = vmatprep.subr.mxu0 %v663
    %769 = vmatpush2.msra.mxu0 %v662
    %770 = vmatprep.mubr.f32.mxu0 %v627
    %771 = vmatmul.mubr.f32.gmra.mxu0 %v626
    %v772 = vpop.f32.mrf.mxu0
    %v773 = vadd.f32 %v699, %v772
    %v774 = vpop.f32.mrf.mxu0
    %v775 = vadd.f32 %v703, %v774
    %776 = vdwg.mxu0
    %v777 = vmul.f32 %v773, 0.01
    %v778 = vmul.f32 %v775, 0.01
    %v779 = vmax.f32 %v773, %v777
    %v780 = vmax.f32 %v775, %v778
    %s781 = sshll.u32 %s474, 4
    %782 = dma.done %s99, %s781
    %v783 = vld [vmem:[#allocation4] sm:$0xff]
    %v784 = vld [vmem:[#allocation4 + $0x8] sm:$0xff]
    %v785 = vld [vmem:[#allocation4 + $0x10] sm:$0xff]
    %v786 = vld [vmem:[#allocation4 + $0x18] sm:$0xff]
    %v787 = vld [vmem:[#allocation4 + $0x20] sm:$0xff]
    %v788 = vld [vmem:[#allocation4 + $0x28] sm:$0xff]
    %v789 = vld [vmem:[#allocation4 + $0x30] sm:$0xff]
    %v790 = vld [vmem:[#allocation4 + $0x38] sm:$0xff]
    %v791 = vld [vmem:[#allocation4 + $0x40] sm:$0xff]
    %v792 = vld [vmem:[#allocation4 + $0x48] sm:$0xff]
    %v793 = vld [vmem:[#allocation4 + $0x50] sm:$0xff]
    %v794 = vld [vmem:[#allocation4 + $0x58] sm:$0xff]
    %v795 = vld [vmem:[#allocation4 + $0x60] sm:$0xff]
    %v796 = vld [vmem:[#allocation4 + $0x68] sm:$0xff]
    %v797 = vld [vmem:[#allocation4 + $0x70] sm:$0xff]
    %v798 = vld [vmem:[#allocation4 + $0x78] sm:$0xff]
    %v799 = vld [vmem:[#allocation4 + $0x80] sm:$0xff]
    %v800 = vld [vmem:[#allocation4 + $0x88] sm:$0xff]
    %v801 = vld [vmem:[#allocation4 + $0x90] sm:$0xff]
    %v802 = vld [vmem:[#allocation4 + $0x98] sm:$0xff]
    %v803 = vld [vmem:[#allocation4 + $0xa0] sm:$0xff]
    %v804 = vld [vmem:[#allocation4 + $0xa8] sm:$0xff]
    %v805 = vld [vmem:[#allocation4 + $0xb0] sm:$0xff]
    %v806 = vld [vmem:[#allocation4 + $0xb8] sm:$0xff]
    %v807 = vld [vmem:[#allocation4 + $0xc0] sm:$0xff]
    %v808 = vld [vmem:[#allocation4 + $0xc8] sm:$0xff]
    %v809 = vld [vmem:[#allocation4 + $0xd0] sm:$0xff]
    %v810 = vld [vmem:[#allocation4 + $0xd8] sm:$0xff]
    %v811 = vld [vmem:[#allocation4 + $0xe0] sm:$0xff]
    %v812 = vld [vmem:[#allocation4 + $0xe8] sm:$0xff]
    %v813 = vld [vmem:[#allocation4 + $0xf0] sm:$0xff]
    %v814 = vld [vmem:[#allocation4 + $0xf8] sm:$0xff]
    %v815 = vld [vmem:[#allocation4 + $0x100] sm:$0xff]
    %v816 = vld [vmem:[#allocation4 + $0x108] sm:$0xff]
    %v817 = vld [vmem:[#allocation4 + $0x110] sm:$0xff]
    %v818 = vld [vmem:[#allocation4 + $0x118] sm:$0xff]
    %v819 = vld [vmem:[#allocation4 + $0x120] sm:$0xff]
    %v820 = vld [vmem:[#allocation4 + $0x128] sm:$0xff]
    %v821 = vld [vmem:[#allocation4 + $0x130] sm:$0xff]
    %v822 = vld [vmem:[#allocation4 + $0x138] sm:$0xff]
    %v823 = vld [vmem:[#allocation4 + $0x140] sm:$0xff]
    %v824 = vld [vmem:[#allocation4 + $0x148] sm:$0xff]
    %v825 = vld [vmem:[#allocation4 + $0x150] sm:$0xff]
    %v826 = vld [vmem:[#allocation4 + $0x158] sm:$0xff]
    %v827 = vld [vmem:[#allocation4 + $0x160] sm:$0xff]
    %v828 = vld [vmem:[#allocation4 + $0x168] sm:$0xff]
    %v829 = vld [vmem:[#allocation4 + $0x170] sm:$0xff]
    %v830 = vld [vmem:[#allocation4 + $0x178] sm:$0xff]
    %v831 = vld [vmem:[#allocation4 + $0x180] sm:$0xff]
    %v832 = vld [vmem:[#allocation4 + $0x188] sm:$0xff]
    %v833 = vld [vmem:[#allocation4 + $0x190] sm:$0xff]
    %v834 = vld [vmem:[#allocation4 + $0x198] sm:$0xff]
    %v835 = vld [vmem:[#allocation4 + $0x1a0] sm:$0xff]
    %v836 = vld [vmem:[#allocation4 + $0x1a8] sm:$0xff]
    %v837 = vld [vmem:[#allocation4 + $0x1b0] sm:$0xff]
    %v838 = vld [vmem:[#allocation4 + $0x1b8] sm:$0xff]
    %v839 = vld [vmem:[#allocation4 + $0x1c0] sm:$0xff]
    %v840 = vld [vmem:[#allocation4 + $0x1c8] sm:$0xff]
    %v841 = vld [vmem:[#allocation4 + $0x1d0] sm:$0xff]
    %v842 = vld [vmem:[#allocation4 + $0x1d8] sm:$0xff]
    %v843 = vld [vmem:[#allocation4 + $0x1e0] sm:$0xff]
    %v844 = vld [vmem:[#allocation4 + $0x1e8] sm:$0xff]
    %v845 = vld [vmem:[#allocation4 + $0x1f0] sm:$0xff]
    %v846 = vld [vmem:[#allocation4 + $0x1f8] sm:$0xff]
    %v847 = vld [vmem:[%s7] sm:$0x3]
    %v849 = vlaneseq
    %v850 = vshrl.u32 %v849, 7
    %v851 = vsub.s32 0, %v850
    %v852 = vrot.slane %v847, %v851
    %v853 = vlaneseq
    %v854 = vshrl.u32 %v853, 7
    %v855 = vsub.s32 1, %v854
    %v856 = vrot.slane %v847, %v855
    %859 = vmatprep.subr.mxu0 %v814
    %860 = vmatpush1.msra.mxu0 %v813
    %861 = vmatprep.subr.mxu0 %v812
    %862 = vmatpush1.msra.mxu0 %v811
    %863 = vmatprep.subr.mxu0 %v810
    %864 = vmatpush1.msra.mxu0 %v809
    %865 = vmatprep.subr.mxu0 %v808
    %866 = vmatpush1.msra.mxu0 %v807
    %867 = vmatprep.subr.mxu0 %v806
    %868 = vmatpush1.msra.mxu0 %v805
    %869 = vmatprep.subr.mxu0 %v804
    %870 = vmatpush1.msra.mxu0 %v803
    %871 = vmatprep.subr.mxu0 %v802
    %872 = vmatpush1.msra.mxu0 %v801
    %873 = vmatprep.subr.mxu0 %v800
    %874 = vmatpush1.msra.mxu0 %v799
    %875 = vmatprep.subr.mxu0 %v798
    %876 = vmatpush1.msra.mxu0 %v797
    %877 = vmatprep.subr.mxu0 %v796
    %878 = vmatpush1.msra.mxu0 %v795
    %879 = vmatprep.subr.mxu0 %v794
    %880 = vmatpush1.msra.mxu0 %v793
    %881 = vmatprep.subr.mxu0 %v792
    %882 = vmatpush1.msra.mxu0 %v791
    %883 = vmatprep.subr.mxu0 %v790
    %884 = vmatpush1.msra.mxu0 %v789
    %885 = vmatprep.subr.mxu0 %v788
    %886 = vmatpush1.msra.mxu0 %v787
    %887 = vmatprep.subr.mxu0 %v786
    %888 = vmatpush1.msra.mxu0 %v785
    %889 = vmatprep.subr.mxu0 %v784
    %890 = vmatpush1.msra.mxu0 %v783
    %891 = vmatprep.subr.mxu0 %v846
    %892 = vmatpush2.msra.mxu0 %v845
    %893 = vmatprep.subr.mxu0 %v844
    %894 = vmatpush2.msra.mxu0 %v843
    %895 = vmatprep.subr.mxu0 %v842
    %896 = vmatpush2.msra.mxu0 %v841
    %897 = vmatprep.subr.mxu0 %v840
    %898 = vmatpush2.msra.mxu0 %v839
    %899 = vmatprep.subr.mxu0 %v838
    %900 = vmatpush2.msra.mxu0 %v837
    %901 = vmatprep.subr.mxu0 %v836
    %902 = vmatpush2.msra.mxu0 %v835
    %903 = vmatprep.subr.mxu0 %v834
    %904 = vmatpush2.msra.mxu0 %v833
    %905 = vmatprep.subr.mxu0 %v832
    %906 = vmatpush2.msra.mxu0 %v831
    %907 = vmatprep.subr.mxu0 %v830
    %908 = vmatpush2.msra.mxu0 %v829
    %909 = vmatprep.subr.mxu0 %v828
    %910 = vmatpush2.msra.mxu0 %v827
    %911 = vmatprep.subr.mxu0 %v826
    %912 = vmatpush2.msra.mxu0 %v825
    %913 = vmatprep.subr.mxu0 %v824
    %914 = vmatpush2.msra.mxu0 %v823
    %915 = vmatprep.subr.mxu0 %v822
    %916 = vmatpush2.msra.mxu0 %v821
    %917 = vmatprep.subr.mxu0 %v820
    %918 = vmatpush2.msra.mxu0 %v819
    %919 = vmatprep.subr.mxu0 %v818
    %920 = vmatpush2.msra.mxu0 %v817
    %921 = vmatprep.subr.mxu0 %v816
    %922 = vmatpush2.msra.mxu0 %v815
    %923 = vmatprep.mubr.f32.mxu0 %v780
    %924 = vmatmul.mubr.f32.gmra.mxu0 %v779
    %v925 = vpop.f32.mrf.mxu0
    %v926 = vadd.f32 %v852, %v925
    %v927 = vpop.f32.mrf.mxu0
    %v928 = vadd.f32 %v856, %v927
    %929 = vdwg.mxu0
    %v930 = vmul.f32 %v926, 0.01
    %v931 = vmul.f32 %v928, 0.01
    %v932 = vmax.f32 %v926, %v930
    %v933 = vmax.f32 %v928, %v931
    %s934 = smul.u32 256, 1
    %s935 = sshll.u32 %s934, 4
    %936 = dma.done %s111, %s935
    %v937 = vld [vmem:[#allocation5] sm:$0xff]
    %v938 = vld [vmem:[#allocation5 + $0x8] sm:$0xff]
    %v939 = vld [vmem:[#allocation5 + $0x10] sm:$0xff]
    %v940 = vld [vmem:[#allocation5 + $0x18] sm:$0xff]
    %v941 = vld [vmem:[#allocation5 + $0x20] sm:$0xff]
    %v942 = vld [vmem:[#allocation5 + $0x28] sm:$0xff]
    %v943 = vld [vmem:[#allocation5 + $0x30] sm:$0xff]
    %v944 = vld [vmem:[#allocation5 + $0x38] sm:$0xff]
    %v945 = vld [vmem:[#allocation5 + $0x40] sm:$0xff]
    %v946 = vld [vmem:[#allocation5 + $0x48] sm:$0xff]
    %v947 = vld [vmem:[#allocation5 + $0x50] sm:$0xff]
    %v948 = vld [vmem:[#allocation5 + $0x58] sm:$0xff]
    %v949 = vld [vmem:[#allocation5 + $0x60] sm:$0xff]
    %v950 = vld [vmem:[#allocation5 + $0x68] sm:$0xff]
    %v951 = vld [vmem:[#allocation5 + $0x70] sm:$0xff]
    %v952 = vld [vmem:[#allocation5 + $0x78] sm:$0xff]
    %v953 = vld [vmem:[#allocation5 + $0x80] sm:$0xff]
    %v954 = vld [vmem:[#allocation5 + $0x88] sm:$0xff]
    %v955 = vld [vmem:[#allocation5 + $0x90] sm:$0xff]
    %v956 = vld [vmem:[#allocation5 + $0x98] sm:$0xff]
    %v957 = vld [vmem:[#allocation5 + $0xa0] sm:$0xff]
    %v958 = vld [vmem:[#allocation5 + $0xa8] sm:$0xff]
    %v959 = vld [vmem:[#allocation5 + $0xb0] sm:$0xff]
    %v960 = vld [vmem:[#allocation5 + $0xb8] sm:$0xff]
    %v961 = vld [vmem:[#allocation5 + $0xc0] sm:$0xff]
    %v962 = vld [vmem:[#allocation5 + $0xc8] sm:$0xff]
    %v963 = vld [vmem:[#allocation5 + $0xd0] sm:$0xff]
    %v964 = vld [vmem:[#allocation5 + $0xd8] sm:$0xff]
    %v965 = vld [vmem:[#allocation5 + $0xe0] sm:$0xff]
    %v966 = vld [vmem:[#allocation5 + $0xe8] sm:$0xff]
    %v967 = vld [vmem:[#allocation5 + $0xf0] sm:$0xff]
    %v968 = vld [vmem:[#allocation5 + $0xf8] sm:$0xff]
    %v969 = vld [vmem:[%s8] sm:$0x1]
    %v971 = vlaneseq
    %v972 = vshrl.u32 %v971, 7
    %v973 = vsub.s32 0, %v972
    %v974 = vrot.slane %v969, %v973
    %976 = vmatprep.subr.mxu0 0.0
    %977 = vmatpush1.msra.mxu0 %v952
    %978 = vmatprep.subr.mxu0 0.0
    %979 = vmatpush1.msra.mxu0 %v951
    %980 = vmatprep.subr.mxu0 0.0
    %981 = vmatpush1.msra.mxu0 %v950
    %982 = vmatprep.subr.mxu0 0.0
    %983 = vmatpush1.msra.mxu0 %v949
    %984 = vmatprep.subr.mxu0 0.0
    %985 = vmatpush1.msra.mxu0 %v948
    %986 = vmatprep.subr.mxu0 0.0
    %987 = vmatpush1.msra.mxu0 %v947
    %988 = vmatprep.subr.mxu0 0.0
    %989 = vmatpush1.msra.mxu0 %v946
    %990 = vmatprep.subr.mxu0 0.0
    %991 = vmatpush1.msra.mxu0 %v945
    %992 = vmatprep.subr.mxu0 0.0
    %993 = vmatpush1.msra.mxu0 %v944
    %994 = vmatprep.subr.mxu0 0.0
    %995 = vmatpush1.msra.mxu0 %v943
    %996 = vmatprep.subr.mxu0 0.0
    %997 = vmatpush1.msra.mxu0 %v942
    %998 = vmatprep.subr.mxu0 0.0
    %999 = vmatpush1.msra.mxu0 %v941
    %1000 = vmatprep.subr.mxu0 0.0
    %1001 = vmatpush1.msra.mxu0 %v940
    %1002 = vmatprep.subr.mxu0 0.0
    %1003 = vmatpush1.msra.mxu0 %v939
    %1004 = vmatprep.subr.mxu0 0.0
    %1005 = vmatpush1.msra.mxu0 %v938
    %1006 = vmatprep.subr.mxu0 0.0
    %1007 = vmatpush1.msra.mxu0 %v937
    %1008 = vmatprep.subr.mxu0 0.0
    %1009 = vmatpush2.msra.mxu0 %v968
    %1010 = vmatprep.subr.mxu0 0.0
    %1011 = vmatpush2.msra.mxu0 %v967
    %1012 = vmatprep.subr.mxu0 0.0
    %1013 = vmatpush2.msra.mxu0 %v966
    %1014 = vmatprep.subr.mxu0 0.0
    %1015 = vmatpush2.msra.mxu0 %v965
    %1016 = vmatprep.subr.mxu0 0.0
    %1017 = vmatpush2.msra.mxu0 %v964
    %1018 = vmatprep.subr.mxu0 0.0
    %1019 = vmatpush2.msra.mxu0 %v963
    %1020 = vmatprep.subr.mxu0 0.0
    %1021 = vmatpush2.msra.mxu0 %v962
    %1022 = vmatprep.subr.mxu0 0.0
    %1023 = vmatpush2.msra.mxu0 %v961
    %1024 = vmatprep.subr.mxu0 0.0
    %1025 = vmatpush2.msra.mxu0 %v960
    %1026 = vmatprep.subr.mxu0 0.0
    %1027 = vmatpush2.msra.mxu0 %v959
    %1028 = vmatprep.subr.mxu0 0.0
    %1029 = vmatpush2.msra.mxu0 %v958
    %1030 = vmatprep.subr.mxu0 0.0
    %1031 = vmatpush2.msra.mxu0 %v957
    %1032 = vmatprep.subr.mxu0 0.0
    %1033 = vmatpush2.msra.mxu0 %v956
    %1034 = vmatprep.subr.mxu0 0.0
    %1035 = vmatpush2.msra.mxu0 %v955
    %1036 = vmatprep.subr.mxu0 0.0
    %1037 = vmatpush2.msra.mxu0 %v954
    %1038 = vmatprep.subr.mxu0 0.0
    %1039 = vmatpush2.msra.mxu0 %v953
    %1040 = vmatprep.mubr.f32.mxu0 %v933
    %1041 = vmatmul.mubr.f32.gmra.mxu0 %v932
    %v1042 = vpop.f32.mrf.mxu0
    %v1043 = vadd.f32 %v974, %v1042
    %v1044 = vpop.f32.mrf.mxu0
    %1045 = vdwg.mxu0
    %v1046 = vmul.f32 %v1043, 0.01
    %v1047 = vmax.f32 %v1043, %v1046
    %v1048 = vlaneseq
    %v1049 = vand.u32 %v1048, 127
    %vm1050 = vcmp.lt.s32.totalorder %v1049, 2
    %v1051 = vsel %vm1050, %v1047, -1e+30
    %1052 = vmax.xlane.f32.xlu0 %v1051
    %v1053 = vpop.xlane.xlu0 %1052
    %v1054 = vsub.f32 %v1051, %v1053
    %v1055 = vmul.f32 %v1054, 1.442695
    %v1056 = vpow.pop %v1055
    %1057 = vadd.xlane.f32.xlu0 %v1056
    %v1058 = vpop.xlane.xlu0 %1057
    %v1059 = vrcp.pop %v1058
    %v1060 = vmul.f32 %v1056, %v1059
    %1061 = vst [vmem:[#allocation13] sm:$0xff] %v1060
    // Predicated region
    $region66: #{tpu_custom_call.1} parent=1 // pred_check
      _
    $region67: #{tpu_custom_call.1} parent=1 // pred_check_branch
      %1063 = sbr.rel (0) target = $region69
    $region68: #{tpu_custom_call.1} parent=1 // pred_region
      %s1065 = ssub.s32 128, 128
      %1066 = vsyncadd [#allocation9], %s1065
      %s1068 = sshll.u32 [#allocation13], 4
      %s1069 = int_to_ptr.vmem [resolvable:$true] %s1068
      %1071 = dma.vmem_to_hbm [thread:$0]  %s1069, 128, %s13, [#allocation9]
    $region69: #{tpu_custom_call.1} parent=1 // pred_fallthru
      _
    // Predicated region
    $region70: #{tpu_custom_call.1} parent=1 // pred_check
      _
    $region71: #{tpu_custom_call.1} parent=1 // pred_check_branch
      %1073 = sbr.rel (0) target = $region73
    $region72: #{tpu_custom_call.1} parent=1 // pred_region
      %1074 = dma.done [#allocation9], 128
    $region73: #{tpu_custom_call.1} parent=1 // pred_fallthru
      _
    %1075 = vsyncpa [#allocation8], 1
    %1076 = vsyncpa [#allocation11], 1
    %1077 = vsyncpa [#allocation9], 1
  %1078 = vsyncmov [#allocation6]
  %s1079 = vpop.sfrf %1078
  %p1080 = scmp.eq.s32.totalorder %s1079, 0
  %p1081 = pneg %p1080
  %1083 = shalt.err (%p1081)
  %s1084 = scalar_lea.sflag [#allocation6], 1
  %1085 = vsyncmov %s1084
  %s1086 = vpop.sfrf %1085
  %p1087 = scmp.eq.s32.totalorder %s1086, 0
  %p1088 = pneg %p1087
  %1090 = shalt.err (%p1088)
  %s1091 = scalar_lea.sflag [#allocation6], 2
  %1092 = vsyncmov %s1091
  %s1093 = vpop.sfrf %1092
  %p1094 = scmp.eq.s32.totalorder %s1093, 0
  %p1095 = pneg %p1094
  %1097 = shalt.err (%p1095)
  %s1098 = scalar_lea.sflag [#allocation6], 3
  %1099 = vsyncmov %s1098
  %s1100 = vpop.sfrf %1099
  %p1101 = scmp.eq.s32.totalorder %s1100, 0
  %p1102 = pneg %p1101
  %1104 = shalt.err (%p1102)

</llo_original>
